<compile_context>
chip_gen: v7x
topology: tpu7x:2x2x1
jax: 0.10.0
libtpu: 0.0.40
codegen_flags: <defaults>
</compile_context>

<pallas_src>
import functools

import jax
import jax.numpy as jnp
from jax import lax
from jax.experimental import pallas as pl
from jax.experimental.pallas import tpu as pltpu


def _relu6(x):
    return jnp.minimum(jnp.maximum(x, 0.0), 6.0)


def inverted_residual_kernel(
    x_ref,      # (bblk, Cin, H*W)   lane-dense NC(HW) input block
    w1t_ref,    # (Chid, Cin)        1x1 expand weights (BN1 scale folded), channel-major
    b1_ref,     # (Chid, 1)          folded BN1 bias
    wdw_ref,    # (Chid, 9)          3x3 depthwise weights (BN2 scale folded), tap minor
    b2_ref,     # (Chid, 1)          folded BN2 bias
    w3t_ref,    # (Cout, Chid)       1x1 project weights (BN3 scale folded), channel-major
    b3_ref,     # (Cout, 1)          folded BN3 bias
    o_ref,      # (bblk, Cout, H*W)  lane-dense NC(HW) output block
    *,
    use_res: bool, H: int, W: int, bblk: int, matmul_dtype,
):
    HW = H * W

    # Loop-invariant small operands (hoisted out of the per-image loop).
    w1t = w1t_ref[...]
    w3t = w3t_ref[...]
    b1 = b1_ref[...]
    b2 = b2_ref[...]
    b3 = b3_ref[...]

    # Flattened-spatial (lane) coordinates used for the depthwise border masks.
    pos = lax.broadcasted_iota(jnp.int32, (1, HW), 1)
    if W & (W - 1) == 0:                       # power-of-two fast path: no int div
        xpos = pos & (W - 1)
        ypos = pos >> (W.bit_length() - 1)
    else:
        xpos = pos % W
        ypos = pos // W

    def body(b, carry):
        x_img = x_ref[b].astype(jnp.float32)                    # (Cin, HW), lane-dense

        # ---- 1x1 expand conv (BN1 folded) + bias + ReLU6 (output lane-dense).
        h = jnp.dot(w1t, x_img.astype(matmul_dtype),
                    preferred_element_type=jnp.float32) + b1     # (Chid, HW)
        h = _relu6(h)

        # ---- 3x3 depthwise conv, stride 1, pad 1: center tap + 8 lane-rolls
        #      with border masks (no padded scratch, no unaligned slices).
        acc = h * wdw_ref[:, 4:5]                                # center tap (dy=dx=1)
        for dy in range(3):
            for dx in range(3):
                if dy == 1 and dx == 1:
                    continue
                oy, ox = dy - 1, dx - 1
                shift = (-(oy * W + ox)) % HW                    # rolled[p] = h[p + oy*W + ox]
                rolled = pltpu.roll(h, shift=shift, axis=1)
                conds = []
                if oy == -1:
                    conds.append(ypos >= 1)
                elif oy == 1:
                    conds.append(ypos < H - 1)
                if ox == -1:
                    conds.append(xpos >= 1)
                elif ox == 1:
                    conds.append(xpos < W - 1)
                mask = conds[0]
                for c in conds[1:]:
                    mask = mask & c
                tap = wdw_ref[:, dy * 3 + dx:dy * 3 + dx + 1]    # (Chid, 1)
                acc = acc + jnp.where(mask, rolled, 0.0) * tap
        h2 = _relu6(acc + b2)                                    # (Chid, HW)

        # ---- 1x1 project conv (BN3 folded) + bias (+ residual), all lane-dense.
        out = jnp.dot(w3t, h2.astype(matmul_dtype),
                      preferred_element_type=jnp.float32) + b3   # (Cout, HW)
        if use_res:
            out = out + x_img
        o_ref[b] = out.astype(o_ref.dtype)
        return carry

    if bblk <= 8:
        for b in range(bblk):        # small static trip-count: unrolled, static indices
            body(b, None)
    else:
        lax.fori_loop(0, bblk, body, None)


def _choose_bblk(batch, per_image_bytes, target_bytes=1 << 20):
    """Images per grid step: whole batch for tiny problems (minimal fixed
    overhead), otherwise the largest divisor of `batch` that keeps the block
    under ~target_bytes while leaving >= 2 grid steps for DMA/compute overlap."""
    if batch * per_image_bytes <= target_bytes:
        return batch
    divisors = [d for d in range(1, batch + 1) if batch % d == 0]
    ok = [d for d in divisors
          if d * per_image_bytes <= target_bytes and batch // d >= 2]
    return max(ok) if ok else 1


def inverted_residual_pallas(x_nchw, params, use_res, *,
                             matmul_dtype=jnp.float32, bblk=None):
    """x_nchw: (B, Cin, H, W) float32 (PyTorch NCHW) -> (B, Cout, H, W) float32."""
    B, Cin, H, W = x_nchw.shape
    w1, s1, b1, wdw, s2, b2, w3, s3, b3 = params
    Chid = w1.shape[1]
    Cout = w3.shape[1]
    HW = H * W
    assert HW % 128 == 0, (
        "lane-dense kernel requires H*W to be a multiple of 128 "
        "(pad spatially or use a fallback path for other shapes)")
    if use_res:
        assert Cin == Cout, "residual connection requires inp == oup"
    # TODO(synk): stride=2 depthwise subsampling and the expand_ratio==1 variant
    # (no expand conv) are not fused by this kernel.
    # TODO(synk): for small B on v7x, additionally tile H (1-row halo) so each
    # TensorCore gets >=2 grid steps and input/output DMA overlaps compute.

    # Fold BN scales into the conv weights, channel-major for (C, HW) matmuls.
    w1t = (w1 * s1[None, :]).T.astype(matmul_dtype)               # (Chid, Cin)
    w3t = (w3 * s3[None, :]).T.astype(matmul_dtype)               # (Cout, Chid)
    wdw_t = (wdw * s2[None, None, :]).reshape(9, Chid).T          # (Chid, 9)
    wdw_t = wdw_t.astype(jnp.float32)
    b1c = b1.reshape(Chid, 1).astype(jnp.float32)
    b2c = b2.reshape(Chid, 1).astype(jnp.float32)
    b3c = b3.reshape(Cout, 1).astype(jnp.float32)

    # NCHW is already lane-dense for (C, H*W) slabs: pure reshape, no transpose.
    x_flat = x_nchw.reshape(B, Cin, HW)

    if bblk is None:
        bblk = _choose_bblk(B, per_image_bytes=(Cin + Cout) * HW * 4)
    assert B % bblk == 0
    grid = (B // bblk,)

    kernel = functools.partial(
        inverted_residual_kernel, use_res=use_res, H=H, W=W, bblk=bblk,
        matmul_dtype=matmul_dtype)

    out_flat = pl.pallas_call(
        kernel,
        out_shape=jax.ShapeDtypeStruct((B, Cout, HW), x_nchw.dtype),
        grid_spec=pltpu.PrefetchScalarGridSpec(
            num_scalar_prefetch=0,
            grid=grid,
            in_specs=[
                pl.BlockSpec((bblk, Cin, HW), lambda g: (g, 0, 0)),
                pl.BlockSpec((Chid, Cin), lambda g: (0, 0)),
                pl.BlockSpec((Chid, 1), lambda g: (0, 0)),
                pl.BlockSpec((Chid, 9), lambda g: (0, 0)),
                pl.BlockSpec((Chid, 1), lambda g: (0, 0)),
                pl.BlockSpec((Cout, Chid), lambda g: (0, 0)),
                pl.BlockSpec((Cout, 1), lambda g: (0, 0)),
            ],
            out_specs=pl.BlockSpec((bblk, Cout, HW), lambda g: (g, 0, 0)),
        ),
        compiler_params=pltpu.CompilerParams(
            dimension_semantics=("parallel",)),
    )(x_flat, w1t, b1c, wdw_t, b2c, w3t, b3c)

    return out_flat.reshape(B, Cout, H, W)


def _fold_bn(gamma, beta, mean, var, eps=1e-5):
    scale = gamma / jnp.sqrt(var + eps)
    bias = beta - mean * scale
    return scale.astype(jnp.float32), bias.astype(jnp.float32)


def make_params(key, inp, oup, expand_ratio):
    """Deterministic synthetic parameters matching the PyTorch module's shapes
    (Conv2d weights transposed into channel-last matmul form, BN stats folded
    into per-channel scale/bias)."""
    assert expand_ratio > 1  # TODO(synk): expand_ratio == 1 variant not fused here
    hidden = int(inp * expand_ratio)
    ks = jax.random.split(key, 12)

    # Conv2d(inp, hidden, 1).weight (hidden, inp, 1, 1) -> (inp, hidden)
    w1 = jax.random.normal(ks[0], (inp, hidden), jnp.float32) * 0.2
    # Depthwise Conv2d(hidden, hidden, 3, groups=hidden).weight (hidden,1,3,3) -> (3,3,hidden)
    wdw = jax.random.normal(ks[1], (3, 3, hidden), jnp.float32) * 0.2
    # Conv2d(hidden, oup, 1).weight (oup, hidden, 1, 1) -> (hidden, oup)
    w3 = jax.random.normal(ks[2], (hidden, oup), jnp.float32) * 0.2

    def bn(kg, kb, km, kv, c):
        gamma = 1.0 + 0.1 * jax.random.normal(kg, (c,), jnp.float32)
        beta = 0.1 * jax.random.normal(kb, (c,), jnp.float32)
        mean = 0.1 * jax.random.normal(km, (c,), jnp.float32)
        var = 0.5 + jnp.abs(jax.random.normal(kv, (c,), jnp.float32))
        return _fold_bn(gamma, beta, mean, var)

    s1, b1 = bn(ks[3], ks[4], ks[5], ks[6], hidden)
    s2, b2 = bn(ks[7], ks[8], ks[9], ks[10], hidden)
    s3, b3 = bn(ks[11], ks[3], ks[7], ks[11], oup)  # reuse keys deterministically
    return (w1, s1, b1, wdw, s2, b2, w3, s3, b3)


def inverted_residual_reference(x, params, use_res):
    """Pure-JAX NCHW reference (unfolded scale/bias form) for correctness."""
    w1, s1, b1, wdw, s2, b2, w3, s3, b3 = params
    B, Cin, H, W = x.shape
    h = jnp.einsum("bchw,cd->bdhw", x, w1)
    h = _relu6(h * s1[None, :, None, None] + b1[None, :, None, None])
    pad = jnp.pad(h, ((0, 0), (0, 0), (1, 1), (1, 1)))
    acc = jnp.zeros_like(h)
    for dy in range(3):
        for dx in range(3):
            acc = acc + (pad[:, :, dy:dy + H, dx:dx + W]
                         * wdw[dy, dx, :][None, :, None, None])
    h2 = _relu6(acc * s2[None, :, None, None] + b2[None, :, None, None])
    out = jnp.einsum("bchw,cd->bdhw", h2, w3)
    out = out * s3[None, :, None, None] + b3[None, :, None, None]
    if use_res:
        out = out + x
    return out


if __name__ == "__main__":
    # Module configuration: InvertedResidual(inp=8, oup=8, stride=1, expand_ratio=6)
    # -> hidden_dim = 48, use_res_connect = True
    inp, oup, stride, expand_ratio = 8, 8, 1, 6
    assert stride == 1  # TODO(synk): stride=2 variant not implemented in-kernel
    use_res = (stride == 1) and (inp == oup)

    B, H, W = 2, 16, 16
    key = jax.random.PRNGKey(0)
    kx, kp = jax.random.split(key)

    # PyTorch-convention input: NCHW (used directly, no transposes needed).
    x_nchw = jax.random.normal(kx, (B, inp, H, W), jnp.float32)
    params = make_params(kp, inp, oup, expand_ratio)

    # NOTE: on v6e/v7x, pass matmul_dtype=jnp.bfloat16 for bf16-native MXU.
    out_nchw = inverted_residual_pallas(x_nchw, params, use_res)
    jax.block_until_ready(out_nchw)

    ref_nchw = inverted_residual_reference(x_nchw, params, use_res)

    assert out_nchw.shape == (B, oup, H, W)
    max_err = float(jnp.max(jnp.abs(out_nchw - ref_nchw)))
    assert jnp.allclose(out_nchw, ref_nchw, atol=1e-2, rtol=1e-2), max_err
    print("KERNEL_OK")
</pallas_src>

<mosaic_0001>
module attributes {stable_mosaic.version = 11 : i64} {
  func.func @inverted_residual_kernel(%arg0: i32, %arg1: memref<2x8x256xf32, #tpu.memory_space<vmem>>, %arg2: memref<48x8xf32, #tpu.memory_space<vmem>>, %arg3: memref<48x1xf32, #tpu.memory_space<vmem>>, %arg4: memref<48x9xf32, #tpu.memory_space<vmem>>, %arg5: memref<48x1xf32, #tpu.memory_space<vmem>>, %arg6: memref<8x48xf32, #tpu.memory_space<vmem>>, %arg7: memref<8x1xf32, #tpu.memory_space<vmem>>, %arg8: memref<2x8x256xf32, #tpu.memory_space<vmem>>) attributes {dimension_semantics = [#tpu.dimension_semantics<parallel>], iteration_bounds = array<i64: 1>, scalar_prefetch = 0 : i64, scratch_operands = 0 : i64, tpu.core_type = #tpu.core_type<tc>, window_params = [{transform_indices = @transform_0, window_bounds = array<i64: 2, 8, 256>}, {pipeline_mode = #tpu.pipeline_mode<synchronous>, transform_indices = @transform_1, window_bounds = array<i64: 48, 8>}, {pipeline_mode = #tpu.pipeline_mode<synchronous>, transform_indices = @transform_2, window_bounds = array<i64: 48, 1>}, {pipeline_mode = #tpu.pipeline_mode<synchronous>, transform_indices = @transform_3, window_bounds = array<i64: 48, 9>}, {pipeline_mode = #tpu.pipeline_mode<synchronous>, transform_indices = @transform_4, window_bounds = array<i64: 48, 1>}, {pipeline_mode = #tpu.pipeline_mode<synchronous>, transform_indices = @transform_5, window_bounds = array<i64: 8, 48>}, {pipeline_mode = #tpu.pipeline_mode<synchronous>, transform_indices = @transform_6, window_bounds = array<i64: 8, 1>}, {transform_indices = @transform_7, window_bounds = array<i64: 2, 8, 256>}]} {
    %c0 = arith.constant 0 : index
    %c0_0 = arith.constant 0 : index
    %0 = vector.load %arg2[%c0, %c0_0] : memref<48x8xf32, #tpu.memory_space<vmem>>, vector<48x8xf32>
    %c0_1 = arith.constant 0 : index
    %c0_2 = arith.constant 0 : index
    %1 = vector.load %arg6[%c0_1, %c0_2] : memref<8x48xf32, #tpu.memory_space<vmem>>, vector<8x48xf32>
    %c0_3 = arith.constant 0 : index
    %c0_4 = arith.constant 0 : index
    %2 = vector.load %arg3[%c0_3, %c0_4] : memref<48x1xf32, #tpu.memory_space<vmem>>, vector<48x1xf32>
    %c0_5 = arith.constant 0 : index
    %c0_6 = arith.constant 0 : index
    %3 = vector.load %arg5[%c0_5, %c0_6] : memref<48x1xf32, #tpu.memory_space<vmem>>, vector<48x1xf32>
    %c0_7 = arith.constant 0 : index
    %c0_8 = arith.constant 0 : index
    %4 = vector.load %arg7[%c0_7, %c0_8] : memref<8x1xf32, #tpu.memory_space<vmem>>, vector<8x1xf32>
    %5 = tpu.iota {dimensions = array<i32: 1>} : vector<1x256xi32>
    %c15_i32 = arith.constant 15 : i32
    %6 = vector.broadcast %c15_i32 : i32 to vector<1x256xi32>
    %7 = arith.andi %5, %6 : vector<1x256xi32>
    %c4_i32 = arith.constant 4 : i32
    %8 = vector.broadcast %c4_i32 : i32 to vector<1x256xi32>
    %9 = arith.shrsi %5, %8 : vector<1x256xi32>
    %c0_9 = arith.constant 0 : index
    %c0_10 = arith.constant 0 : index
    %c0_11 = arith.constant 0 : index
    %10 = vector.load %arg1[%c0_9, %c0_10, %c0_11] : memref<2x8x256xf32, #tpu.memory_space<vmem>>, vector<1x8x256xf32>
    %11 = vector.shape_cast %10 : vector<1x8x256xf32> to vector<8x256xf32>
    %cst = arith.constant dense<0.000000e+00> : vector<48x256xf32>
    %12 = tpu.matmul %0, %11, %cst {dimension_numbers = #tpu.dot_dimension_numbers<[1], [0], [0], [1], [0, 0, 1, 1], [], []>} : vector<48x8xf32>, vector<8x256xf32>, vector<48x256xf32> -> vector<48x256xf32>
    %13 = vector.broadcast %2 : vector<48x1xf32> to vector<48x256xf32>
    %14 = arith.addf %12, %13 : vector<48x256xf32>
    %cst_12 = arith.constant 0.000000e+00 : f32
    %15 = vector.broadcast %cst_12 : f32 to vector<48x256xf32>
    %16 = arith.maximumf %14, %15 : vector<48x256xf32>
    %cst_13 = arith.constant 6.000000e+00 : f32
    %17 = vector.broadcast %cst_13 : f32 to vector<48x256xf32>
    %18 = arith.minimumf %16, %17 : vector<48x256xf32>
    %c0_14 = arith.constant 0 : index
    %c4 = arith.constant 4 : index
    %19 = vector.load %arg4[%c0_14, %c4] : memref<48x9xf32, #tpu.memory_space<vmem>>, vector<48x1xf32>
    %20 = vector.broadcast %19 : vector<48x1xf32> to vector<48x256xf32>
    %21 = arith.mulf %18, %20 : vector<48x256xf32>
    %c17_i32 = arith.constant 17 : i32
    %22 = tpu.dynamic_rotate %18 by %c17_i32 dim 1 : vector<48x256xf32>, i32 -> vector<48x256xf32>
    %c1_i32 = arith.constant 1 : i32
    %23 = vector.broadcast %c1_i32 : i32 to vector<1x256xi32>
    %24 = arith.cmpi sge, %9, %23 : vector<1x256xi32>
    %c1_i32_15 = arith.constant 1 : i32
    %25 = vector.broadcast %c1_i32_15 : i32 to vector<1x256xi32>
    %26 = arith.cmpi sge, %7, %25 : vector<1x256xi32>
    %27 = arith.andi %24, %26 : vector<1x256xi1>
    %c0_16 = arith.constant 0 : index
    %c0_17 = arith.constant 0 : index
    %28 = vector.load %arg4[%c0_16, %c0_17] : memref<48x9xf32, #tpu.memory_space<vmem>>, vector<48x1xf32>
    %cst_18 = arith.constant 0.000000e+00 : f32
    %29 = vector.shape_cast %27 : vector<1x256xi1> to vector<1x256xi1>
    %30 = vector.broadcast %29 : vector<1x256xi1> to vector<48x256xi1>
    %31 = vector.broadcast %cst_18 : f32 to vector<48x256xf32>
    %32 = arith.select %30, %22, %31 : vector<48x256xi1>, vector<48x256xf32>
    %33 = vector.broadcast %28 : vector<48x1xf32> to vector<48x256xf32>
    %34 = arith.mulf %32, %33 : vector<48x256xf32>
    %35 = arith.addf %21, %34 : vector<48x256xf32>
    %c16_i32 = arith.constant 16 : i32
    %36 = tpu.dynamic_rotate %18 by %c16_i32 dim 1 : vector<48x256xf32>, i32 -> vector<48x256xf32>
    %c1_i32_19 = arith.constant 1 : i32
    %37 = vector.broadcast %c1_i32_19 : i32 to vector<1x256xi32>
    %38 = arith.cmpi sge, %9, %37 : vector<1x256xi32>
    %c0_20 = arith.constant 0 : index
    %c1 = arith.constant 1 : index
    %39 = vector.load %arg4[%c0_20, %c1] : memref<48x9xf32, #tpu.memory_space<vmem>>, vector<48x1xf32>
    %cst_21 = arith.constant 0.000000e+00 : f32
    %40 = vector.shape_cast %38 : vector<1x256xi1> to vector<1x256xi1>
    %41 = vector.broadcast %40 : vector<1x256xi1> to vector<48x256xi1>
    %42 = vector.broadcast %cst_21 : f32 to vector<48x256xf32>
    %43 = arith.select %41, %36, %42 : vector<48x256xi1>, vector<48x256xf32>
    %44 = vector.broadcast %39 : vector<48x1xf32> to vector<48x256xf32>
    %45 = arith.mulf %43, %44 : vector<48x256xf32>
    %46 = arith.addf %35, %45 : vector<48x256xf32>
    %c15_i32_22 = arith.constant 15 : i32
    %47 = tpu.dynamic_rotate %18 by %c15_i32_22 dim 1 : vector<48x256xf32>, i32 -> vector<48x256xf32>
    %c1_i32_23 = arith.constant 1 : i32
    %48 = vector.broadcast %c1_i32_23 : i32 to vector<1x256xi32>
    %49 = arith.cmpi sge, %9, %48 : vector<1x256xi32>
    %c15_i32_24 = arith.constant 15 : i32
    %50 = vector.broadcast %c15_i32_24 : i32 to vector<1x256xi32>
    %51 = arith.cmpi slt, %7, %50 : vector<1x256xi32>
    %52 = arith.andi %49, %51 : vector<1x256xi1>
    %c0_25 = arith.constant 0 : index
    %c2 = arith.constant 2 : index
    %53 = vector.load %arg4[%c0_25, %c2] : memref<48x9xf32, #tpu.memory_space<vmem>>, vector<48x1xf32>
    %cst_26 = arith.constant 0.000000e+00 : f32
    %54 = vector.shape_cast %52 : vector<1x256xi1> to vector<1x256xi1>
    %55 = vector.broadcast %54 : vector<1x256xi1> to vector<48x256xi1>
    %56 = vector.broadcast %cst_26 : f32 to vector<48x256xf32>
    %57 = arith.select %55, %47, %56 : vector<48x256xi1>, vector<48x256xf32>
    %58 = vector.broadcast %53 : vector<48x1xf32> to vector<48x256xf32>
    %59 = arith.mulf %57, %58 : vector<48x256xf32>
    %60 = arith.addf %46, %59 : vector<48x256xf32>
    %c1_i32_27 = arith.constant 1 : i32
    %61 = tpu.dynamic_rotate %18 by %c1_i32_27 dim 1 : vector<48x256xf32>, i32 -> vector<48x256xf32>
    %c1_i32_28 = arith.constant 1 : i32
    %62 = vector.broadcast %c1_i32_28 : i32 to vector<1x256xi32>
    %63 = arith.cmpi sge, %7, %62 : vector<1x256xi32>
    %c0_29 = arith.constant 0 : index
    %c3 = arith.constant 3 : index
    %64 = vector.load %arg4[%c0_29, %c3] : memref<48x9xf32, #tpu.memory_space<vmem>>, vector<48x1xf32>
    %cst_30 = arith.constant 0.000000e+00 : f32
    %65 = vector.shape_cast %63 : vector<1x256xi1> to vector<1x256xi1>
    %66 = vector.broadcast %65 : vector<1x256xi1> to vector<48x256xi1>
    %67 = vector.broadcast %cst_30 : f32 to vector<48x256xf32>
    %68 = arith.select %66, %61, %67 : vector<48x256xi1>, vector<48x256xf32>
    %69 = vector.broadcast %64 : vector<48x1xf32> to vector<48x256xf32>
    %70 = arith.mulf %68, %69 : vector<48x256xf32>
    %71 = arith.addf %60, %70 : vector<48x256xf32>
    %c255_i32 = arith.constant 255 : i32
    %72 = tpu.dynamic_rotate %18 by %c255_i32 dim 1 : vector<48x256xf32>, i32 -> vector<48x256xf32>
    %c15_i32_31 = arith.constant 15 : i32
    %73 = vector.broadcast %c15_i32_31 : i32 to vector<1x256xi32>
    %74 = arith.cmpi slt, %7, %73 : vector<1x256xi32>
    %c0_32 = arith.constant 0 : index
    %c5 = arith.constant 5 : index
    %75 = vector.load %arg4[%c0_32, %c5] : memref<48x9xf32, #tpu.memory_space<vmem>>, vector<48x1xf32>
    %cst_33 = arith.constant 0.000000e+00 : f32
    %76 = vector.shape_cast %74 : vector<1x256xi1> to vector<1x256xi1>
    %77 = vector.broadcast %76 : vector<1x256xi1> to vector<48x256xi1>
    %78 = vector.broadcast %cst_33 : f32 to vector<48x256xf32>
    %79 = arith.select %77, %72, %78 : vector<48x256xi1>, vector<48x256xf32>
    %80 = vector.broadcast %75 : vector<48x1xf32> to vector<48x256xf32>
    %81 = arith.mulf %79, %80 : vector<48x256xf32>
    %82 = arith.addf %71, %81 : vector<48x256xf32>
    %c241_i32 = arith.constant 241 : i32
    %83 = tpu.dynamic_rotate %18 by %c241_i32 dim 1 : vector<48x256xf32>, i32 -> vector<48x256xf32>
    %c15_i32_34 = arith.constant 15 : i32
    %84 = vector.broadcast %c15_i32_34 : i32 to vector<1x256xi32>
    %85 = arith.cmpi slt, %9, %84 : vector<1x256xi32>
    %c1_i32_35 = arith.constant 1 : i32
    %86 = vector.broadcast %c1_i32_35 : i32 to vector<1x256xi32>
    %87 = arith.cmpi sge, %7, %86 : vector<1x256xi32>
    %88 = arith.andi %85, %87 : vector<1x256xi1>
    %c0_36 = arith.constant 0 : index
    %c6 = arith.constant 6 : index
    %89 = vector.load %arg4[%c0_36, %c6] : memref<48x9xf32, #tpu.memory_space<vmem>>, vector<48x1xf32>
    %cst_37 = arith.constant 0.000000e+00 : f32
    %90 = vector.shape_cast %88 : vector<1x256xi1> to vector<1x256xi1>
    %91 = vector.broadcast %90 : vector<1x256xi1> to vector<48x256xi1>
    %92 = vector.broadcast %cst_37 : f32 to vector<48x256xf32>
    %93 = arith.select %91, %83, %92 : vector<48x256xi1>, vector<48x256xf32>
    %94 = vector.broadcast %89 : vector<48x1xf32> to vector<48x256xf32>
    %95 = arith.mulf %93, %94 : vector<48x256xf32>
    %96 = arith.addf %82, %95 : vector<48x256xf32>
    %c240_i32 = arith.constant 240 : i32
    %97 = tpu.dynamic_rotate %18 by %c240_i32 dim 1 : vector<48x256xf32>, i32 -> vector<48x256xf32>
    %c15_i32_38 = arith.constant 15 : i32
    %98 = vector.broadcast %c15_i32_38 : i32 to vector<1x256xi32>
    %99 = arith.cmpi slt, %9, %98 : vector<1x256xi32>
    %c0_39 = arith.constant 0 : index
    %c7 = arith.constant 7 : index
    %100 = vector.load %arg4[%c0_39, %c7] : memref<48x9xf32, #tpu.memory_space<vmem>>, vector<48x1xf32>
    %cst_40 = arith.constant 0.000000e+00 : f32
    %101 = vector.shape_cast %99 : vector<1x256xi1> to vector<1x256xi1>
    %102 = vector.broadcast %101 : vector<1x256xi1> to vector<48x256xi1>
    %103 = vector.broadcast %cst_40 : f32 to vector<48x256xf32>
    %104 = arith.select %102, %97, %103 : vector<48x256xi1>, vector<48x256xf32>
    %105 = vector.broadcast %100 : vector<48x1xf32> to vector<48x256xf32>
    %106 = arith.mulf %104, %105 : vector<48x256xf32>
    %107 = arith.addf %96, %106 : vector<48x256xf32>
    %c239_i32 = arith.constant 239 : i32
    %108 = tpu.dynamic_rotate %18 by %c239_i32 dim 1 : vector<48x256xf32>, i32 -> vector<48x256xf32>
    %c15_i32_41 = arith.constant 15 : i32
    %109 = vector.broadcast %c15_i32_41 : i32 to vector<1x256xi32>
    %110 = arith.cmpi slt, %9, %109 : vector<1x256xi32>
    %c15_i32_42 = arith.constant 15 : i32
    %111 = vector.broadcast %c15_i32_42 : i32 to vector<1x256xi32>
    %112 = arith.cmpi slt, %7, %111 : vector<1x256xi32>
    %113 = arith.andi %110, %112 : vector<1x256xi1>
    %c0_43 = arith.constant 0 : index
    %c8 = arith.constant 8 : index
    %114 = vector.load %arg4[%c0_43, %c8] : memref<48x9xf32, #tpu.memory_space<vmem>>, vector<48x1xf32>
    %cst_44 = arith.constant 0.000000e+00 : f32
    %115 = vector.shape_cast %113 : vector<1x256xi1> to vector<1x256xi1>
    %116 = vector.broadcast %115 : vector<1x256xi1> to vector<48x256xi1>
    %117 = vector.broadcast %cst_44 : f32 to vector<48x256xf32>
    %118 = arith.select %116, %108, %117 : vector<48x256xi1>, vector<48x256xf32>
    %119 = vector.broadcast %114 : vector<48x1xf32> to vector<48x256xf32>
    %120 = arith.mulf %118, %119 : vector<48x256xf32>
    %121 = arith.addf %107, %120 : vector<48x256xf32>
    %122 = vector.broadcast %3 : vector<48x1xf32> to vector<48x256xf32>
    %123 = arith.addf %121, %122 : vector<48x256xf32>
    %cst_45 = arith.constant 0.000000e+00 : f32
    %124 = vector.broadcast %cst_45 : f32 to vector<48x256xf32>
    %125 = arith.maximumf %123, %124 : vector<48x256xf32>
    %cst_46 = arith.constant 6.000000e+00 : f32
    %126 = vector.broadcast %cst_46 : f32 to vector<48x256xf32>
    %127 = arith.minimumf %125, %126 : vector<48x256xf32>
    %cst_47 = arith.constant dense<0.000000e+00> : vector<8x256xf32>
    %128 = tpu.matmul %1, %127, %cst_47 {dimension_numbers = #tpu.dot_dimension_numbers<[1], [0], [0], [1], [0, 0, 1, 1], [], []>} : vector<8x48xf32>, vector<48x256xf32>, vector<8x256xf32> -> vector<8x256xf32>
    %129 = vector.broadcast %4 : vector<8x1xf32> to vector<8x256xf32>
    %130 = arith.addf %128, %129 : vector<8x256xf32>
    %131 = arith.addf %130, %11 : vector<8x256xf32>
    %c0_48 = arith.constant 0 : index
    %c0_49 = arith.constant 0 : index
    %c0_50 = arith.constant 0 : index
    %132 = vector.load %arg8[%c0_48, %c0_49, %c0_50] : memref<2x8x256xf32, #tpu.memory_space<vmem>>, vector<1x8x256xf32>
    %133 = vector.shape_cast %132 : vector<1x8x256xf32> to vector<8x256xf32>
    %134 = vector.shape_cast %131 : vector<8x256xf32> to vector<1x8x256xf32>
    tpu.vector_store %arg8[%c0_48, %c0_49, %c0_50], %134 {strides = array<i32>} : memref<2x8x256xf32, #tpu.memory_space<vmem>>, vector<1x8x256xf32>,
    %c1_51 = arith.constant 1 : index
    %c0_52 = arith.constant 0 : index
    %c0_53 = arith.constant 0 : index
    %135 = vector.load %arg1[%c1_51, %c0_52, %c0_53] : memref<2x8x256xf32, #tpu.memory_space<vmem>>, vector<1x8x256xf32>
    %136 = vector.shape_cast %135 : vector<1x8x256xf32> to vector<8x256xf32>
    %cst_54 = arith.constant dense<0.000000e+00> : vector<48x256xf32>
    %137 = tpu.matmul %0, %136, %cst_54 {dimension_numbers = #tpu.dot_dimension_numbers<[1], [0], [0], [1], [0, 0, 1, 1], [], []>} : vector<48x8xf32>, vector<8x256xf32>, vector<48x256xf32> -> vector<48x256xf32>
    %138 = vector.broadcast %2 : vector<48x1xf32> to vector<48x256xf32>
    %139 = arith.addf %137, %138 : vector<48x256xf32>
    %cst_55 = arith.constant 0.000000e+00 : f32
    %140 = vector.broadcast %cst_55 : f32 to vector<48x256xf32>
    %141 = arith.maximumf %139, %140 : vector<48x256xf32>
    %cst_56 = arith.constant 6.000000e+00 : f32
    %142 = vector.broadcast %cst_56 : f32 to vector<48x256xf32>
    %143 = arith.minimumf %141, %142 : vector<48x256xf32>
    %c0_57 = arith.constant 0 : index
    %c4_58 = arith.constant 4 : index
    %144 = vector.load %arg4[%c0_57, %c4_58] : memref<48x9xf32, #tpu.memory_space<vmem>>, vector<48x1xf32>
    %145 = vector.broadcast %144 : vector<48x1xf32> to vector<48x256xf32>
    %146 = arith.mulf %143, %145 : vector<48x256xf32>
    %c17_i32_59 = arith.constant 17 : i32
    %147 = tpu.dynamic_rotate %143 by %c17_i32_59 dim 1 : vector<48x256xf32>, i32 -> vector<48x256xf32>
    %c1_i32_60 = arith.constant 1 : i32
    %148 = vector.broadcast %c1_i32_60 : i32 to vector<1x256xi32>
    %149 = arith.cmpi sge, %9, %148 : vector<1x256xi32>
    %c1_i32_61 = arith.constant 1 : i32
    %150 = vector.broadcast %c1_i32_61 : i32 to vector<1x256xi32>
    %151 = arith.cmpi sge, %7, %150 : vector<1x256xi32>
    %152 = arith.andi %149, %151 : vector<1x256xi1>
    %c0_62 = arith.constant 0 : index
    %c0_63 = arith.constant 0 : index
    %153 = vector.load %arg4[%c0_62, %c0_63] : memref<48x9xf32, #tpu.memory_space<vmem>>, vector<48x1xf32>
    %cst_64 = arith.constant 0.000000e+00 : f32
    %154 = vector.shape_cast %152 : vector<1x256xi1> to vector<1x256xi1>
    %155 = vector.broadcast %154 : vector<1x256xi1> to vector<48x256xi1>
    %156 = vector.broadcast %cst_64 : f32 to vector<48x256xf32>
    %157 = arith.select %155, %147, %156 : vector<48x256xi1>, vector<48x256xf32>
    %158 = vector.broadcast %153 : vector<48x1xf32> to vector<48x256xf32>
    %159 = arith.mulf %157, %158 : vector<48x256xf32>
    %160 = arith.addf %146, %159 : vector<48x256xf32>
    %c16_i32_65 = arith.constant 16 : i32
    %161 = tpu.dynamic_rotate %143 by %c16_i32_65 dim 1 : vector<48x256xf32>, i32 -> vector<48x256xf32>
    %c1_i32_66 = arith.constant 1 : i32
    %162 = vector.broadcast %c1_i32_66 : i32 to vector<1x256xi32>
    %163 = arith.cmpi sge, %9, %162 : vector<1x256xi32>
    %c0_67 = arith.constant 0 : index
    %c1_68 = arith.constant 1 : index
    %164 = vector.load %arg4[%c0_67, %c1_68] : memref<48x9xf32, #tpu.memory_space<vmem>>, vector<48x1xf32>
    %cst_69 = arith.constant 0.000000e+00 : f32
    %165 = vector.shape_cast %163 : vector<1x256xi1> to vector<1x256xi1>
    %166 = vector.broadcast %165 : vector<1x256xi1> to vector<48x256xi1>
    %167 = vector.broadcast %cst_69 : f32 to vector<48x256xf32>
    %168 = arith.select %166, %161, %167 : vector<48x256xi1>, vector<48x256xf32>
    %169 = vector.broadcast %164 : vector<48x1xf32> to vector<48x256xf32>
    %170 = arith.mulf %168, %169 : vector<48x256xf32>
    %171 = arith.addf %160, %170 : vector<48x256xf32>
    %c15_i32_70 = arith.constant 15 : i32
    %172 = tpu.dynamic_rotate %143 by %c15_i32_70 dim 1 : vector<48x256xf32>, i32 -> vector<48x256xf32>
    %c1_i32_71 = arith.constant 1 : i32
    %173 = vector.broadcast %c1_i32_71 : i32 to vector<1x256xi32>
    %174 = arith.cmpi sge, %9, %173 : vector<1x256xi32>
    %c15_i32_72 = arith.constant 15 : i32
    %175 = vector.broadcast %c15_i32_72 : i32 to vector<1x256xi32>
    %176 = arith.cmpi slt, %7, %175 : vector<1x256xi32>
    %177 = arith.andi %174, %176 : vector<1x256xi1>
    %c0_73 = arith.constant 0 : index
    %c2_74 = arith.constant 2 : index
    %178 = vector.load %arg4[%c0_73, %c2_74] : memref<48x9xf32, #tpu.memory_space<vmem>>, vector<48x1xf32>
    %cst_75 = arith.constant 0.000000e+00 : f32
    %179 = vector.shape_cast %177 : vector<1x256xi1> to vector<1x256xi1>
    %180 = vector.broadcast %179 : vector<1x256xi1> to vector<48x256xi1>
    %181 = vector.broadcast %cst_75 : f32 to vector<48x256xf32>
    %182 = arith.select %180, %172, %181 : vector<48x256xi1>, vector<48x256xf32>
    %183 = vector.broadcast %178 : vector<48x1xf32> to vector<48x256xf32>
    %184 = arith.mulf %182, %183 : vector<48x256xf32>
    %185 = arith.addf %171, %184 : vector<48x256xf32>
    %c1_i32_76 = arith.constant 1 : i32
    %186 = tpu.dynamic_rotate %143 by %c1_i32_76 dim 1 : vector<48x256xf32>, i32 -> vector<48x256xf32>
    %c1_i32_77 = arith.constant 1 : i32
    %187 = vector.broadcast %c1_i32_77 : i32 to vector<1x256xi32>
    %188 = arith.cmpi sge, %7, %187 : vector<1x256xi32>
    %c0_78 = arith.constant 0 : index
    %c3_79 = arith.constant 3 : index
    %189 = vector.load %arg4[%c0_78, %c3_79] : memref<48x9xf32, #tpu.memory_space<vmem>>, vector<48x1xf32>
    %cst_80 = arith.constant 0.000000e+00 : f32
    %190 = vector.shape_cast %188 : vector<1x256xi1> to vector<1x256xi1>
    %191 = vector.broadcast %190 : vector<1x256xi1> to vector<48x256xi1>
    %192 = vector.broadcast %cst_80 : f32 to vector<48x256xf32>
    %193 = arith.select %191, %186, %192 : vector<48x256xi1>, vector<48x256xf32>
    %194 = vector.broadcast %189 : vector<48x1xf32> to vector<48x256xf32>
    %195 = arith.mulf %193, %194 : vector<48x256xf32>
    %196 = arith.addf %185, %195 : vector<48x256xf32>
    %c255_i32_81 = arith.constant 255 : i32
    %197 = tpu.dynamic_rotate %143 by %c255_i32_81 dim 1 : vector<48x256xf32>, i32 -> vector<48x256xf32>
    %c15_i32_82 = arith.constant 15 : i32
    %198 = vector.broadcast %c15_i32_82 : i32 to vector<1x256xi32>
    %199 = arith.cmpi slt, %7, %198 : vector<1x256xi32>
    %c0_83 = arith.constant 0 : index
    %c5_84 = arith.constant 5 : index
    %200 = vector.load %arg4[%c0_83, %c5_84] : memref<48x9xf32, #tpu.memory_space<vmem>>, vector<48x1xf32>
    %cst_85 = arith.constant 0.000000e+00 : f32
    %201 = vector.shape_cast %199 : vector<1x256xi1> to vector<1x256xi1>
    %202 = vector.broadcast %201 : vector<1x256xi1> to vector<48x256xi1>
    %203 = vector.broadcast %cst_85 : f32 to vector<48x256xf32>
    %204 = arith.select %202, %197, %203 : vector<48x256xi1>, vector<48x256xf32>
    %205 = vector.broadcast %200 : vector<48x1xf32> to vector<48x256xf32>
    %206 = arith.mulf %204, %205 : vector<48x256xf32>
    %207 = arith.addf %196, %206 : vector<48x256xf32>
    %c241_i32_86 = arith.constant 241 : i32
    %208 = tpu.dynamic_rotate %143 by %c241_i32_86 dim 1 : vector<48x256xf32>, i32 -> vector<48x256xf32>
    %c15_i32_87 = arith.constant 15 : i32
    %209 = vector.broadcast %c15_i32_87 : i32 to vector<1x256xi32>
    %210 = arith.cmpi slt, %9, %209 : vector<1x256xi32>
    %c1_i32_88 = arith.constant 1 : i32
    %211 = vector.broadcast %c1_i32_88 : i32 to vector<1x256xi32>
    %212 = arith.cmpi sge, %7, %211 : vector<1x256xi32>
    %213 = arith.andi %210, %212 : vector<1x256xi1>
    %c0_89 = arith.constant 0 : index
    %c6_90 = arith.constant 6 : index
    %214 = vector.load %arg4[%c0_89, %c6_90] : memref<48x9xf32, #tpu.memory_space<vmem>>, vector<48x1xf32>
    %cst_91 = arith.constant 0.000000e+00 : f32
    %215 = vector.shape_cast %213 : vector<1x256xi1> to vector<1x256xi1>
    %216 = vector.broadcast %215 : vector<1x256xi1> to vector<48x256xi1>
    %217 = vector.broadcast %cst_91 : f32 to vector<48x256xf32>
    %218 = arith.select %216, %208, %217 : vector<48x256xi1>, vector<48x256xf32>
    %219 = vector.broadcast %214 : vector<48x1xf32> to vector<48x256xf32>
    %220 = arith.mulf %218, %219 : vector<48x256xf32>
    %221 = arith.addf %207, %220 : vector<48x256xf32>
    %c240_i32_92 = arith.constant 240 : i32
    %222 = tpu.dynamic_rotate %143 by %c240_i32_92 dim 1 : vector<48x256xf32>, i32 -> vector<48x256xf32>
    %c15_i32_93 = arith.constant 15 : i32
    %223 = vector.broadcast %c15_i32_93 : i32 to vector<1x256xi32>
    %224 = arith.cmpi slt, %9, %223 : vector<1x256xi32>
    %c0_94 = arith.constant 0 : index
    %c7_95 = arith.constant 7 : index
    %225 = vector.load %arg4[%c0_94, %c7_95] : memref<48x9xf32, #tpu.memory_space<vmem>>, vector<48x1xf32>
    %cst_96 = arith.constant 0.000000e+00 : f32
    %226 = vector.shape_cast %224 : vector<1x256xi1> to vector<1x256xi1>
    %227 = vector.broadcast %226 : vector<1x256xi1> to vector<48x256xi1>
    %228 = vector.broadcast %cst_96 : f32 to vector<48x256xf32>
    %229 = arith.select %227, %222, %228 : vector<48x256xi1>, vector<48x256xf32>
    %230 = vector.broadcast %225 : vector<48x1xf32> to vector<48x256xf32>
    %231 = arith.mulf %229, %230 : vector<48x256xf32>
    %232 = arith.addf %221, %231 : vector<48x256xf32>
    %c239_i32_97 = arith.constant 239 : i32
    %233 = tpu.dynamic_rotate %143 by %c239_i32_97 dim 1 : vector<48x256xf32>, i32 -> vector<48x256xf32>
    %c15_i32_98 = arith.constant 15 : i32
    %234 = vector.broadcast %c15_i32_98 : i32 to vector<1x256xi32>
    %235 = arith.cmpi slt, %9, %234 : vector<1x256xi32>
    %c15_i32_99 = arith.constant 15 : i32
    %236 = vector.broadcast %c15_i32_99 : i32 to vector<1x256xi32>
    %237 = arith.cmpi slt, %7, %236 : vector<1x256xi32>
    %238 = arith.andi %235, %237 : vector<1x256xi1>
    %c0_100 = arith.constant 0 : index
    %c8_101 = arith.constant 8 : index
    %239 = vector.load %arg4[%c0_100, %c8_101] : memref<48x9xf32, #tpu.memory_space<vmem>>, vector<48x1xf32>
    %cst_102 = arith.constant 0.000000e+00 : f32
    %240 = vector.shape_cast %238 : vector<1x256xi1> to vector<1x256xi1>
    %241 = vector.broadcast %240 : vector<1x256xi1> to vector<48x256xi1>
    %242 = vector.broadcast %cst_102 : f32 to vector<48x256xf32>
    %243 = arith.select %241, %233, %242 : vector<48x256xi1>, vector<48x256xf32>
    %244 = vector.broadcast %239 : vector<48x1xf32> to vector<48x256xf32>
    %245 = arith.mulf %243, %244 : vector<48x256xf32>
    %246 = arith.addf %232, %245 : vector<48x256xf32>
    %247 = vector.broadcast %3 : vector<48x1xf32> to vector<48x256xf32>
    %248 = arith.addf %246, %247 : vector<48x256xf32>
    %cst_103 = arith.constant 0.000000e+00 : f32
    %249 = vector.broadcast %cst_103 : f32 to vector<48x256xf32>
    %250 = arith.maximumf %248, %249 : vector<48x256xf32>
    %cst_104 = arith.constant 6.000000e+00 : f32
    %251 = vector.broadcast %cst_104 : f32 to vector<48x256xf32>
    %252 = arith.minimumf %250, %251 : vector<48x256xf32>
    %cst_105 = arith.constant dense<0.000000e+00> : vector<8x256xf32>
    %253 = tpu.matmul %1, %252, %cst_105 {dimension_numbers = #tpu.dot_dimension_numbers<[1], [0], [0], [1], [0, 0, 1, 1], [], []>} : vector<8x48xf32>, vector<48x256xf32>, vector<8x256xf32> -> vector<8x256xf32>
    %254 = vector.broadcast %4 : vector<8x1xf32> to vector<8x256xf32>
    %255 = arith.addf %253, %254 : vector<8x256xf32>
    %256 = arith.addf %255, %136 : vector<8x256xf32>
    %c1_106 = arith.constant 1 : index
    %c0_107 = arith.constant 0 : index
    %c0_108 = arith.constant 0 : index
    %257 = vector.load %arg8[%c1_106, %c0_107, %c0_108] : memref<2x8x256xf32, #tpu.memory_space<vmem>>, vector<1x8x256xf32>
    %258 = vector.shape_cast %257 : vector<1x8x256xf32> to vector<8x256xf32>
    %259 = vector.shape_cast %256 : vector<8x256xf32> to vector<1x8x256xf32>
    tpu.vector_store %arg8[%c1_106, %c0_107, %c0_108], %259 {strides = array<i32>} : memref<2x8x256xf32, #tpu.memory_space<vmem>>, vector<1x8x256xf32>,
    return
  }
  func.func @transform_0(%arg0: i32) -> (i32, i32, i32) {
    %c0_i32 = arith.constant 0 : i32
    %c0_i32_0 = arith.constant 0 : i32
    %c0_i32_1 = arith.constant 0 : i32
    return %arg0, %c0_i32, %c0_i32_0 : i32, i32, i32
  }
  func.func @transform_1(%arg0: i32) -> (i32, i32) {
    %c0_i32 = arith.constant 0 : i32
    %c0_i32_0 = arith.constant 0 : i32
    %c0_i32_1 = arith.constant 0 : i32
    return %c0_i32, %c0_i32_0 : i32, i32
  }
  func.func @transform_2(%arg0: i32) -> (i32, i32) {
    %c0_i32 = arith.constant 0 : i32
    %c0_i32_0 = arith.constant 0 : i32
    %c0_i32_1 = arith.constant 0 : i32
    return %c0_i32, %c0_i32_0 : i32, i32
  }
  func.func @transform_3(%arg0: i32) -> (i32, i32) {
    %c0_i32 = arith.constant 0 : i32
    %c0_i32_0 = arith.constant 0 : i32
    %c0_i32_1 = arith.constant 0 : i32
    return %c0_i32, %c0_i32_0 : i32, i32
  }
  func.func @transform_4(%arg0: i32) -> (i32, i32) {
    %c0_i32 = arith.constant 0 : i32
    %c0_i32_0 = arith.constant 0 : i32
    %c0_i32_1 = arith.constant 0 : i32
    return %c0_i32, %c0_i32_0 : i32, i32
  }
  func.func @transform_5(%arg0: i32) -> (i32, i32) {
    %c0_i32 = arith.constant 0 : i32
    %c0_i32_0 = arith.constant 0 : i32
    %c0_i32_1 = arith.constant 0 : i32
    return %c0_i32, %c0_i32_0 : i32, i32
  }
  func.func @transform_6(%arg0: i32) -> (i32, i32) {
    %c0_i32 = arith.constant 0 : i32
    %c0_i32_0 = arith.constant 0 : i32
    %c0_i32_1 = arith.constant 0 : i32
    return %c0_i32, %c0_i32_0 : i32, i32
  }
  func.func @transform_7(%arg0: i32) -> (i32, i32, i32) {
    %c0_i32 = arith.constant 0 : i32
    %c0_i32_0 = arith.constant 0 : i32
    %c0_i32_1 = arith.constant 0 : i32
    return %arg0, %c0_i32, %c0_i32_0 : i32, i32, i32
  }
}

</mosaic_0001>

<llo_original>
// kernel: tpu_custom_call.1
$region0: #{tpu_custom_call.1}
  #allocation0 [shape = 'u32[]', space=smem, size = 0x4, offset = 0x4, fixed_abs, tag = 'smem constant byte address 0x4 - core index']
  #allocation1 [shape = 'u32[144,128]{1,0:T(1,128)}', space=vmem, size = 0x12000, scoped, tag = 'internal scratch']
  %s0 = inlined_call_operand.vmem [shape: f32[2,8,256], index: 0, kind: input, shape index: {}]
  %s1 = inlined_call_operand.vmem [shape: f32[48,8], index: 1, kind: input, shape index: {}]
  %s2 = inlined_call_operand.vmem [shape: f32[48,1], index: 2, kind: input, shape index: {}]
  %s3 = inlined_call_operand.vmem [shape: f32[48,9], index: 3, kind: input, shape index: {}]
  %s4 = inlined_call_operand.vmem [shape: f32[48,1], index: 4, kind: input, shape index: {}]
  %s5 = inlined_call_operand.vmem [shape: f32[8,48], index: 5, kind: input, shape index: {}]
  %s6 = inlined_call_operand.vmem [shape: f32[8,1], index: 6, kind: input, shape index: {}]
  %s7 = inlined_call_operand.hbm [shape: f32[2,8,256], index: 7, kind: output, shape index: {}]
  %s8 = sld [smem:[#allocation0]]
  $region38: #{tpu_custom_call.1} parent=0
    _
  %s10 = ssub.s32 1, %s8
  %s11 = scalar_select 0, %s10, %s8
  $region1: #{tpu_custom_call.1} parent=0
    #allocation2 [shape = 'u8[16384]{0}', space=vmem, size = 0x4000, scoped, tag = 'output window, operand 0, single buffered']
    #allocation3 [shape = 's32[1]{0}', space=sflag, size = 0x4, scoped, tag = 'scoped memory for tpu_custom_call.1']
    %12 = vsyncpa [#allocation3], 0
    // Predicated region
    $region2: #{tpu_custom_call.1} parent=1 // pred_check
      _
    $region3: #{tpu_custom_call.1} parent=1 // pred_check_branch
      %14 = sbr.rel (0) target = $region5
    $region4: #{tpu_custom_call.1} parent=1 // pred_region
      _
    $region5: #{tpu_custom_call.1} parent=1 // pred_fallthru
      _
    // Predicated region
    $region6: #{tpu_custom_call.1} parent=1 // pred_check
      _
    $region7: #{tpu_custom_call.1} parent=1 // pred_check_branch
      %16 = sbr.rel (0) target = $region9
    $region8: #{tpu_custom_call.1} parent=1 // pred_region
      _
    $region9: #{tpu_custom_call.1} parent=1 // pred_fallthru
      _
    // Predicated region
    $region10: #{tpu_custom_call.1} parent=1 // pred_check
      _
    $region11: #{tpu_custom_call.1} parent=1 // pred_check_branch
      %18 = sbr.rel (0) target = $region13
    $region12: #{tpu_custom_call.1} parent=1 // pred_region
      _
    $region13: #{tpu_custom_call.1} parent=1 // pred_fallthru
      _
    // Predicated region
    $region14: #{tpu_custom_call.1} parent=1 // pred_check
      _
    $region15: #{tpu_custom_call.1} parent=1 // pred_check_branch
      %20 = sbr.rel (0) target = $region17
    $region16: #{tpu_custom_call.1} parent=1 // pred_region
      _
    $region17: #{tpu_custom_call.1} parent=1 // pred_fallthru
      _
    // Predicated region
    $region18: #{tpu_custom_call.1} parent=1 // pred_check
      _
    $region19: #{tpu_custom_call.1} parent=1 // pred_check_branch
      %22 = sbr.rel (0) target = $region21
    $region20: #{tpu_custom_call.1} parent=1 // pred_region
      _
    $region21: #{tpu_custom_call.1} parent=1 // pred_fallthru
      _
    // Predicated region
    $region22: #{tpu_custom_call.1} parent=1 // pred_check
      _
    $region23: #{tpu_custom_call.1} parent=1 // pred_check_branch
      %24 = sbr.rel (0) target = $region25
    $region24: #{tpu_custom_call.1} parent=1 // pred_region
      _
    $region25: #{tpu_custom_call.1} parent=1 // pred_fallthru
      _
    // Predicated region
    $region26: #{tpu_custom_call.1} parent=1 // pred_check
      _
    $region27: #{tpu_custom_call.1} parent=1 // pred_check_branch
      %26 = sbr.rel (0) target = $region29
    $region28: #{tpu_custom_call.1} parent=1 // pred_region
      _
    $region29: #{tpu_custom_call.1} parent=1 // pred_fallthru
      _
    %v27 = vld [vmem:[%s1] sm:$0xff]
    %v28 = vld [vmem:[%s1 + $0x8] sm:$0xff]
    %v29 = vld [vmem:[%s1 + $0x10] sm:$0xff]
    %v30 = vld [vmem:[%s1 + $0x18] sm:$0xff]
    %v31 = vld [vmem:[%s1 + $0x20] sm:$0xff]
    %v32 = vld [vmem:[%s1 + $0x28] sm:$0xff]
    %v33 = vld [vmem:[%s5] sm:$0xff]
    %v34 = vld [vmem:[%s2] sm:$0xff]
    %v35 = vld [vmem:[%s2 + $0x8] sm:$0xff]
    %v36 = vld [vmem:[%s2 + $0x10] sm:$0xff]
    %v37 = vld [vmem:[%s2 + $0x18] sm:$0xff]
    %v38 = vld [vmem:[%s2 + $0x20] sm:$0xff]
    %v39 = vld [vmem:[%s2 + $0x28] sm:$0xff]
    %v40 = vld [vmem:[%s4] sm:$0xff]
    %v41 = vld [vmem:[%s4 + $0x8] sm:$0xff]
    %v42 = vld [vmem:[%s4 + $0x10] sm:$0xff]
    %v43 = vld [vmem:[%s4 + $0x18] sm:$0xff]
    %v44 = vld [vmem:[%s4 + $0x20] sm:$0xff]
    %v45 = vld [vmem:[%s4 + $0x28] sm:$0xff]
    %v46 = vld [vmem:[%s6] sm:$0xff]
    %v47 = vlaneseq
    %v48 = vand.u32 %v47, 127
    %v49 = vadd.s32 %v48, 128
    %v50 = vand.u32 %v48, 15
    %v51 = vand.u32 %v49, 15
    %v52 = vshra.s32 %v48, 4
    %v53 = vshra.s32 %v49, 4
    %v54 = vld [vmem:[%s0] sm:$0xff]
    %v55 = vld [vmem:[%s0 + $0x8] sm:$0xff]
    %57 = vset.pattern.permute.xlu0 0
    %58 = vperm.xlu0 %57, %v34
    %v59 = vpop.permute.xlu0 %58
    %62 = vset.pattern.permute.xlu0 0
    %63 = vperm.xlu0 %62, %v35
    %v64 = vpop.permute.xlu0 %63
    %67 = vset.pattern.permute.xlu0 0
    %68 = vperm.xlu0 %67, %v36
    %v69 = vpop.permute.xlu0 %68
    %72 = vset.pattern.permute.xlu0 0
    %73 = vperm.xlu0 %72, %v37
    %v74 = vpop.permute.xlu0 %73
    %77 = vset.pattern.permute.xlu0 0
    %78 = vperm.xlu0 %77, %v38
    %v79 = vpop.permute.xlu0 %78
    %82 = vset.pattern.permute.xlu0 0
    %83 = vperm.xlu0 %82, %v39
    %v84 = vpop.permute.xlu0 %83
    %vm86 = vcmask 64512
    %v88 = vsel %vm86, %v27, 0
    %v91 = vsel %vm86, %v28, 0
    %v94 = vsel %vm86, %v29, 0
    %v97 = vsel %vm86, %v30, 0
    %v100 = vsel %vm86, %v31, 0
    %v103 = vsel %vm86, %v32, 0
    %105 = vmatprep.subr.mxu0 %v55
    %106 = vmatpush1.msra.mxu0 %v54
    %107 = vmatprep.subr.mxu0 0.0
    %108 = vmatpush1.msra.mxu0 0.0
    %109 = vmatprep.subr.mxu0 0.0
    %110 = vmatpush1.msra.mxu0 0.0
    %111 = vmatprep.subr.mxu0 0.0
    %112 = vmatpush1.msra.mxu0 0.0
    %113 = vmatprep.subr.mxu0 0.0
    %114 = vmatpush1.msra.mxu0 0.0
    %115 = vmatprep.subr.mxu0 0.0
    %116 = vmatpush1.msra.mxu0 0.0
    %117 = vmatprep.subr.mxu0 0.0
    %118 = vmatpush1.msra.mxu0 0.0
    %119 = vmatprep.subr.mxu0 0.0
    %120 = vmatpush1.msra.mxu0 0.0
    %121 = vmatprep.subr.mxu0 0.0
    %122 = vmatpush1.msra.mxu0 0.0
    %123 = vmatprep.subr.mxu0 0.0
    %124 = vmatpush1.msra.mxu0 0.0
    %125 = vmatprep.subr.mxu0 0.0
    %126 = vmatpush1.msra.mxu0 0.0
    %127 = vmatprep.subr.mxu0 0.0
    %128 = vmatpush1.msra.mxu0 0.0
    %129 = vmatprep.subr.mxu0 0.0
    %130 = vmatpush1.msra.mxu0 0.0
    %131 = vmatprep.subr.mxu0 0.0
    %132 = vmatpush1.msra.mxu0 0.0
    %133 = vmatprep.subr.mxu0 0.0
    %134 = vmatpush1.msra.mxu0 0.0
    %135 = vmatprep.subr.mxu0 0.0
    %136 = vmatpush1.msra.mxu0 0.0
    %137 = vmatprep.subr.mxu0 0.0
    %138 = vmatpush1.msra.mxu0 0.0
    %139 = vmatprep.subr.mxu0 0.0
    %140 = vmatpush1.msra.mxu0 0.0
    %141 = vmatprep.subr.mxu0 0.0
    %142 = vmatpush1.msra.mxu0 0.0
    %143 = vmatprep.subr.mxu0 0.0
    %144 = vmatpush1.msra.mxu0 0.0
    %145 = vmatprep.subr.mxu0 0.0
    %146 = vmatpush1.msra.mxu0 0.0
    %147 = vmatprep.subr.mxu0 0.0
    %148 = vmatpush1.msra.mxu0 0.0
    %149 = vmatprep.subr.mxu0 0.0
    %150 = vmatpush1.msra.mxu0 0.0
    %151 = vmatprep.subr.mxu0 0.0
    %152 = vmatpush1.msra.mxu0 0.0
    %153 = vmatprep.subr.mxu0 0.0
    %154 = vmatpush1.msra.mxu0 0.0
    %155 = vmatprep.subr.mxu0 0.0
    %156 = vmatpush1.msra.mxu0 0.0
    %157 = vmatprep.subr.mxu0 0.0
    %158 = vmatpush1.msra.mxu0 0.0
    %159 = vmatprep.subr.mxu0 0.0
    %160 = vmatpush1.msra.mxu0 0.0
    %161 = vmatprep.subr.mxu0 0.0
    %162 = vmatpush1.msra.mxu0 0.0
    %163 = vmatprep.subr.mxu0 0.0
    %164 = vmatpush1.msra.mxu0 0.0
    %165 = vmatprep.subr.mxu0 0.0
    %166 = vmatpush1.msra.mxu0 0.0
    %167 = vmatprep.subr.mxu0 0.0
    %168 = vmatpush1.msra.mxu0 0.0
    %169 = vmatprep.mubr.f32.mxu0 0.0
    %170 = vmatmul.mubr.f32.gmra.mrb[0].mxu0 %v88
    %v171 = vpop.f32.mrb[0].mxu0
    %v172 = vadd.f32 %v59, %v171
    %v173 = vpop.f32.mrb[0].mxu0
    %v174 = vadd.f32 %v59, %v173
    %175 = vmatprep.mubr.f32.mxu0 0.0
    %176 = vmatmul.mubr.f32.gmra.mrb[0].mxu0 %v91
    %v177 = vpop.f32.mrb[0].mxu0
    %v178 = vadd.f32 %v64, %v177
    %v179 = vpop.f32.mrb[0].mxu0
    %v180 = vadd.f32 %v64, %v179
    %181 = vmatprep.mubr.f32.mxu0 0.0
    %182 = vmatmul.mubr.f32.gmra.mrb[0].mxu0 %v94
    %v183 = vpop.f32.mrb[0].mxu0
    %v184 = vadd.f32 %v69, %v183
    %v185 = vpop.f32.mrb[0].mxu0
    %v186 = vadd.f32 %v69, %v185
    %187 = vmatprep.mubr.f32.mxu0 0.0
    %188 = vmatmul.mubr.f32.gmra.mrb[0].mxu0 %v97
    %v189 = vpop.f32.mrb[0].mxu0
    %v190 = vadd.f32 %v74, %v189
    %v191 = vpop.f32.mrb[0].mxu0
    %v192 = vadd.f32 %v74, %v191
    %193 = vmatprep.mubr.f32.mxu0 0.0
    %194 = vmatmul.mubr.f32.gmra.mrb[0].mxu0 %v100
    %v195 = vpop.f32.mrb[0].mxu0
    %v196 = vadd.f32 %v79, %v195
    %v197 = vpop.f32.mrb[0].mxu0
    %v198 = vadd.f32 %v79, %v197
    %199 = vmatprep.mubr.f32.mxu0 0.0
    %200 = vmatmul.mubr.f32.gmra.mrb[0].mxu0 %v103
    %v201 = vpop.f32.mrb[0].mxu0
    %v202 = vadd.f32 %v84, %v201
    %v203 = vpop.f32.mrb[0].mxu0
    %v204 = vadd.f32 %v84, %v203
    %205 = vdwg.mxu0
    %v206 = vmax.f32 %v172, 0.0
    %v207 = vmax.f32 %v174, 0.0
    %v208 = vmax.f32 %v178, 0.0
    %v209 = vmax.f32 %v180, 0.0
    %v210 = vmax.f32 %v184, 0.0
    %v211 = vmax.f32 %v186, 0.0
    %v212 = vmax.f32 %v190, 0.0
    %v213 = vmax.f32 %v192, 0.0
    %v214 = vmax.f32 %v196, 0.0
    %v215 = vmax.f32 %v198, 0.0
    %v216 = vmax.f32 %v202, 0.0
    %v217 = vmax.f32 %v204, 0.0
    %v218 = vmin.f32 %v206, 6.0
    %v219 = vmin.f32 %v207, 6.0
    %v220 = vmin.f32 %v208, 6.0
    %v221 = vmin.f32 %v209, 6.0
    %v222 = vmin.f32 %v210, 6.0
    %v223 = vmin.f32 %v211, 6.0
    %v224 = vmin.f32 %v212, 6.0
    %v225 = vmin.f32 %v213, 6.0
    %v226 = vmin.f32 %v214, 6.0
    %v227 = vmin.f32 %v215, 6.0
    %v228 = vmin.f32 %v216, 6.0
    %v229 = vmin.f32 %v217, 6.0
    %v230 = vld [vmem:[%s3] sm:$0xff]
    %v231 = vld [vmem:[%s3 + $0x8] sm:$0xff]
    %v232 = vld [vmem:[%s3 + $0x10] sm:$0xff]
    %v233 = vld [vmem:[%s3 + $0x18] sm:$0xff]
    %v234 = vld [vmem:[%s3 + $0x20] sm:$0xff]
    %v235 = vld [vmem:[%s3 + $0x28] sm:$0xff]
    %237 = vset.pattern.permute.xlu0 4
    %238 = vperm.xlu0 %237, %v230
    %v239 = vpop.permute.xlu0 %238
    %242 = vset.pattern.permute.xlu0 4
    %243 = vperm.xlu0 %242, %v231
    %v244 = vpop.permute.xlu0 %243
    %247 = vset.pattern.permute.xlu0 4
    %248 = vperm.xlu0 %247, %v232
    %v249 = vpop.permute.xlu0 %248
    %252 = vset.pattern.permute.xlu0 4
    %253 = vperm.xlu0 %252, %v233
    %v254 = vpop.permute.xlu0 %253
    %257 = vset.pattern.permute.xlu0 4
    %258 = vperm.xlu0 %257, %v234
    %v259 = vpop.permute.xlu0 %258
    %262 = vset.pattern.permute.xlu0 4
    %263 = vperm.xlu0 %262, %v235
    %v264 = vpop.permute.xlu0 %263
    %v266 = vmul.f32 %v218, %v239
    %v267 = vmul.f32 %v219, %v239
    %v268 = vmul.f32 %v220, %v244
    %v269 = vmul.f32 %v221, %v244
    %v270 = vmul.f32 %v222, %v249
    %v271 = vmul.f32 %v223, %v249
    %v272 = vmul.f32 %v224, %v254
    %v273 = vmul.f32 %v225, %v254
    %v274 = vmul.f32 %v226, %v259
    %v275 = vmul.f32 %v227, %v259
    %v276 = vmul.f32 %v228, %v264
    %v277 = vmul.f32 %v229, %v264
    %278 = vrot.lane.b32.xlu0 %v218, 17
    %v279 = vpop.permute.xlu0 %278
    %280 = vrot.lane.b32.xlu0 %v220, 17
    %v281 = vpop.permute.xlu0 %280
    %282 = vrot.lane.b32.xlu0 %v222, 17
    %v283 = vpop.permute.xlu0 %282
    %284 = vrot.lane.b32.xlu0 %v224, 17
    %v285 = vpop.permute.xlu0 %284
    %286 = vrot.lane.b32.xlu0 %v226, 17
    %v287 = vpop.permute.xlu0 %286
    %288 = vrot.lane.b32.xlu0 %v228, 17
    %v289 = vpop.permute.xlu0 %288
    %290 = vrot.lane.b32.xlu0 %v219, 17
    %v291 = vpop.permute.xlu0 %290
    %292 = vrot.lane.b32.xlu0 %v221, 17
    %v293 = vpop.permute.xlu0 %292
    %294 = vrot.lane.b32.xlu0 %v223, 17
    %v295 = vpop.permute.xlu0 %294
    %296 = vrot.lane.b32.xlu0 %v225, 17
    %v297 = vpop.permute.xlu0 %296
    %298 = vrot.lane.b32.xlu0 %v227, 17
    %v299 = vpop.permute.xlu0 %298
    %300 = vrot.lane.b32.xlu0 %v229, 17
    %v301 = vpop.permute.xlu0 %300
    %vm302 = vcmp.lt.s32.totalorder %v48, 17
    %v303 = vsel %vm302, %v279, %v291
    %v304 = vsel %vm302, %v281, %v293
    %v305 = vsel %vm302, %v283, %v295
    %v306 = vsel %vm302, %v285, %v297
    %v307 = vsel %vm302, %v287, %v299
    %v308 = vsel %vm302, %v289, %v301
    %v309 = vsel %vm302, %v291, %v279
    %v310 = vsel %vm302, %v293, %v281
    %v311 = vsel %vm302, %v295, %v283
    %v312 = vsel %vm302, %v297, %v285
    %v313 = vsel %vm302, %v299, %v287
    %v314 = vsel %vm302, %v301, %v289
    %vm315 = vcmp.ge.s32.totalorder %v52, 1
    %vm316 = vcmp.ge.s32.totalorder %v53, 1
    %vm317 = vcmp.ge.s32.totalorder %v50, 1
    %vm318 = vcmp.ge.s32.totalorder %v51, 1
    %vm319 = vmand %vm315, %vm317
    %vm320 = vmand %vm316, %vm318
    %v321 = vsel %vm319, 1, 0
    %v322 = vsel %vm320, 1, 0
    %vm323 = vcmp.eq.s32.totalorder %v321, 1
    %vm324 = vcmp.eq.s32.totalorder %v322, 1
    %v325 = vsel %vm323, %v309, 0.0
    %v326 = vsel %vm324, %v303, 0.0
    %v327 = vsel %vm323, %v310, 0.0
    %v328 = vsel %vm324, %v304, 0.0
    %v329 = vsel %vm323, %v311, 0.0
    %v330 = vsel %vm324, %v305, 0.0
    %v331 = vsel %vm323, %v312, 0.0
    %v332 = vsel %vm324, %v306, 0.0
    %v333 = vsel %vm323, %v313, 0.0
    %v334 = vsel %vm324, %v307, 0.0
    %v335 = vsel %vm323, %v314, 0.0
    %v336 = vsel %vm324, %v308, 0.0
    %337 = vset.pattern.permute.xlu0 0
    %338 = vperm.xlu0 %337, %v230
    %v339 = vpop.permute.xlu0 %338
    %341 = vset.pattern.permute.xlu0 0
    %342 = vperm.xlu0 %341, %v231
    %v343 = vpop.permute.xlu0 %342
    %345 = vset.pattern.permute.xlu0 0
    %346 = vperm.xlu0 %345, %v232
    %v347 = vpop.permute.xlu0 %346
    %349 = vset.pattern.permute.xlu0 0
    %350 = vperm.xlu0 %349, %v233
    %v351 = vpop.permute.xlu0 %350
    %353 = vset.pattern.permute.xlu0 0
    %354 = vperm.xlu0 %353, %v234
    %v355 = vpop.permute.xlu0 %354
    %357 = vset.pattern.permute.xlu0 0
    %358 = vperm.xlu0 %357, %v235
    %v359 = vpop.permute.xlu0 %358
    %v361 = vmul.f32 %v325, %v339
    %v362 = vmul.f32 %v326, %v339
    %v363 = vmul.f32 %v327, %v343
    %v364 = vmul.f32 %v328, %v343
    %v365 = vmul.f32 %v329, %v347
    %v366 = vmul.f32 %v330, %v347
    %v367 = vmul.f32 %v331, %v351
    %v368 = vmul.f32 %v332, %v351
    %v369 = vmul.f32 %v333, %v355
    %v370 = vmul.f32 %v334, %v355
    %v371 = vmul.f32 %v335, %v359
    %v372 = vmul.f32 %v336, %v359
    %v373 = vadd.f32 %v266, %v361
    %v374 = vadd.f32 %v267, %v362
    %v375 = vadd.f32 %v268, %v363
    %v376 = vadd.f32 %v269, %v364
    %v377 = vadd.f32 %v270, %v365
    %v378 = vadd.f32 %v271, %v366
    %v379 = vadd.f32 %v272, %v367
    %v380 = vadd.f32 %v273, %v368
    %v381 = vadd.f32 %v274, %v369
    %v382 = vadd.f32 %v275, %v370
    %v383 = vadd.f32 %v276, %v371
    %v384 = vadd.f32 %v277, %v372
    %385 = vrot.lane.b32.xlu0 %v218, 16
    %v386 = vpop.permute.xlu0 %385
    %387 = vrot.lane.b32.xlu0 %v220, 16
    %v388 = vpop.permute.xlu0 %387
    %389 = vrot.lane.b32.xlu0 %v222, 16
    %v390 = vpop.permute.xlu0 %389
    %391 = vrot.lane.b32.xlu0 %v224, 16
    %v392 = vpop.permute.xlu0 %391
    %393 = vrot.lane.b32.xlu0 %v226, 16
    %v394 = vpop.permute.xlu0 %393
    %395 = vrot.lane.b32.xlu0 %v228, 16
    %v396 = vpop.permute.xlu0 %395
    %397 = vrot.lane.b32.xlu0 %v219, 16
    %v398 = vpop.permute.xlu0 %397
    %399 = vrot.lane.b32.xlu0 %v221, 16
    %v400 = vpop.permute.xlu0 %399
    %401 = vrot.lane.b32.xlu0 %v223, 16
    %v402 = vpop.permute.xlu0 %401
    %403 = vrot.lane.b32.xlu0 %v225, 16
    %v404 = vpop.permute.xlu0 %403
    %405 = vrot.lane.b32.xlu0 %v227, 16
    %v406 = vpop.permute.xlu0 %405
    %407 = vrot.lane.b32.xlu0 %v229, 16
    %v408 = vpop.permute.xlu0 %407
    %vm409 = vcmp.lt.s32.totalorder %v48, 16
    %v410 = vsel %vm409, %v386, %v398
    %v411 = vsel %vm409, %v388, %v400
    %v412 = vsel %vm409, %v390, %v402
    %v413 = vsel %vm409, %v392, %v404
    %v414 = vsel %vm409, %v394, %v406
    %v415 = vsel %vm409, %v396, %v408
    %v416 = vsel %vm409, %v398, %v386
    %v417 = vsel %vm409, %v400, %v388
    %v418 = vsel %vm409, %v402, %v390
    %v419 = vsel %vm409, %v404, %v392
    %v420 = vsel %vm409, %v406, %v394
    %v421 = vsel %vm409, %v408, %v396
    %v422 = vsel %vm315, 1, 0
    %v423 = vsel %vm316, 1, 0
    %vm424 = vcmp.eq.s32.totalorder %v422, 1
    %vm425 = vcmp.eq.s32.totalorder %v423, 1
    %v426 = vsel %vm424, %v416, 0.0
    %v427 = vsel %vm425, %v410, 0.0
    %v428 = vsel %vm424, %v417, 0.0
    %v429 = vsel %vm425, %v411, 0.0
    %v430 = vsel %vm424, %v418, 0.0
    %v431 = vsel %vm425, %v412, 0.0
    %v432 = vsel %vm424, %v419, 0.0
    %v433 = vsel %vm425, %v413, 0.0
    %v434 = vsel %vm424, %v420, 0.0
    %v435 = vsel %vm425, %v414, 0.0
    %v436 = vsel %vm424, %v421, 0.0
    %v437 = vsel %vm425, %v415, 0.0
    %438 = vset.pattern.permute.xlu0 1
    %439 = vperm.xlu0 %438, %v230
    %v440 = vpop.permute.xlu0 %439
    %442 = vset.pattern.permute.xlu0 1
    %443 = vperm.xlu0 %442, %v231
    %v444 = vpop.permute.xlu0 %443
    %446 = vset.pattern.permute.xlu0 1
    %447 = vperm.xlu0 %446, %v232
    %v448 = vpop.permute.xlu0 %447
    %450 = vset.pattern.permute.xlu0 1
    %451 = vperm.xlu0 %450, %v233
    %v452 = vpop.permute.xlu0 %451
    %454 = vset.pattern.permute.xlu0 1
    %455 = vperm.xlu0 %454, %v234
    %v456 = vpop.permute.xlu0 %455
    %458 = vset.pattern.permute.xlu0 1
    %459 = vperm.xlu0 %458, %v235
    %v460 = vpop.permute.xlu0 %459
    %v462 = vmul.f32 %v426, %v440
    %v463 = vmul.f32 %v427, %v440
    %v464 = vmul.f32 %v428, %v444
    %v465 = vmul.f32 %v429, %v444
    %v466 = vmul.f32 %v430, %v448
    %v467 = vmul.f32 %v431, %v448
    %v468 = vmul.f32 %v432, %v452
    %v469 = vmul.f32 %v433, %v452
    %v470 = vmul.f32 %v434, %v456
    %v471 = vmul.f32 %v435, %v456
    %v472 = vmul.f32 %v436, %v460
    %v473 = vmul.f32 %v437, %v460
    %v474 = vadd.f32 %v373, %v462
    %v475 = vadd.f32 %v374, %v463
    %v476 = vadd.f32 %v375, %v464
    %v477 = vadd.f32 %v376, %v465
    %v478 = vadd.f32 %v377, %v466
    %v479 = vadd.f32 %v378, %v467
    %v480 = vadd.f32 %v379, %v468
    %v481 = vadd.f32 %v380, %v469
    %v482 = vadd.f32 %v381, %v470
    %v483 = vadd.f32 %v382, %v471
    %v484 = vadd.f32 %v383, %v472
    %v485 = vadd.f32 %v384, %v473
    %486 = vrot.lane.b32.xlu0 %v218, 15
    %v487 = vpop.permute.xlu0 %486
    %488 = vrot.lane.b32.xlu0 %v220, 15
    %v489 = vpop.permute.xlu0 %488
    %490 = vrot.lane.b32.xlu0 %v222, 15
    %v491 = vpop.permute.xlu0 %490
    %492 = vrot.lane.b32.xlu0 %v224, 15
    %v493 = vpop.permute.xlu0 %492
    %494 = vrot.lane.b32.xlu0 %v226, 15
    %v495 = vpop.permute.xlu0 %494
    %496 = vrot.lane.b32.xlu0 %v228, 15
    %v497 = vpop.permute.xlu0 %496
    %498 = vrot.lane.b32.xlu0 %v219, 15
    %v499 = vpop.permute.xlu0 %498
    %500 = vrot.lane.b32.xlu0 %v221, 15
    %v501 = vpop.permute.xlu0 %500
    %502 = vrot.lane.b32.xlu0 %v223, 15
    %v503 = vpop.permute.xlu0 %502
    %504 = vrot.lane.b32.xlu0 %v225, 15
    %v505 = vpop.permute.xlu0 %504
    %506 = vrot.lane.b32.xlu0 %v227, 15
    %v507 = vpop.permute.xlu0 %506
    %508 = vrot.lane.b32.xlu0 %v229, 15
    %v509 = vpop.permute.xlu0 %508
    %vm510 = vcmp.lt.s32.totalorder %v48, 15
    %v511 = vsel %vm510, %v487, %v499
    %v512 = vsel %vm510, %v489, %v501
    %v513 = vsel %vm510, %v491, %v503
    %v514 = vsel %vm510, %v493, %v505
    %v515 = vsel %vm510, %v495, %v507
    %v516 = vsel %vm510, %v497, %v509
    %v517 = vsel %vm510, %v499, %v487
    %v518 = vsel %vm510, %v501, %v489
    %v519 = vsel %vm510, %v503, %v491
    %v520 = vsel %vm510, %v505, %v493
    %v521 = vsel %vm510, %v507, %v495
    %v522 = vsel %vm510, %v509, %v497
    %vm523 = vcmp.lt.s32.totalorder %v50, 15
    %vm524 = vcmp.lt.s32.totalorder %v51, 15
    %vm525 = vmand %vm315, %vm523
    %vm526 = vmand %vm316, %vm524
    %v527 = vsel %vm525, 1, 0
    %v528 = vsel %vm526, 1, 0
    %vm529 = vcmp.eq.s32.totalorder %v527, 1
    %vm530 = vcmp.eq.s32.totalorder %v528, 1
    %v531 = vsel %vm529, %v517, 0.0
    %v532 = vsel %vm530, %v511, 0.0
    %v533 = vsel %vm529, %v518, 0.0
    %v534 = vsel %vm530, %v512, 0.0
    %v535 = vsel %vm529, %v519, 0.0
    %v536 = vsel %vm530, %v513, 0.0
    %v537 = vsel %vm529, %v520, 0.0
    %v538 = vsel %vm530, %v514, 0.0
    %v539 = vsel %vm529, %v521, 0.0
    %v540 = vsel %vm530, %v515, 0.0
    %v541 = vsel %vm529, %v522, 0.0
    %v542 = vsel %vm530, %v516, 0.0
    %543 = vset.pattern.permute.xlu0 2
    %544 = vperm.xlu0 %543, %v230
    %v545 = vpop.permute.xlu0 %544
    %547 = vset.pattern.permute.xlu0 2
    %548 = vperm.xlu0 %547, %v231
    %v549 = vpop.permute.xlu0 %548
    %551 = vset.pattern.permute.xlu0 2
    %552 = vperm.xlu0 %551, %v232
    %v553 = vpop.permute.xlu0 %552
    %555 = vset.pattern.permute.xlu0 2
    %556 = vperm.xlu0 %555, %v233
    %v557 = vpop.permute.xlu0 %556
    %559 = vset.pattern.permute.xlu0 2
    %560 = vperm.xlu0 %559, %v234
    %v561 = vpop.permute.xlu0 %560
    %563 = vset.pattern.permute.xlu0 2
    %564 = vperm.xlu0 %563, %v235
    %v565 = vpop.permute.xlu0 %564
    %v567 = vmul.f32 %v531, %v545
    %v568 = vmul.f32 %v532, %v545
    %v569 = vmul.f32 %v533, %v549
    %v570 = vmul.f32 %v534, %v549
    %v571 = vmul.f32 %v535, %v553
    %v572 = vmul.f32 %v536, %v553
    %v573 = vmul.f32 %v537, %v557
    %v574 = vmul.f32 %v538, %v557
    %v575 = vmul.f32 %v539, %v561
    %v576 = vmul.f32 %v540, %v561
    %v577 = vmul.f32 %v541, %v565
    %v578 = vmul.f32 %v542, %v565
    %v579 = vadd.f32 %v474, %v567
    %v580 = vadd.f32 %v475, %v568
    %v581 = vadd.f32 %v476, %v569
    %v582 = vadd.f32 %v477, %v570
    %v583 = vadd.f32 %v478, %v571
    %v584 = vadd.f32 %v479, %v572
    %v585 = vadd.f32 %v480, %v573
    %v586 = vadd.f32 %v481, %v574
    %v587 = vadd.f32 %v482, %v575
    %v588 = vadd.f32 %v483, %v576
    %v589 = vadd.f32 %v484, %v577
    %v590 = vadd.f32 %v485, %v578
    %591 = vrot.lane.b32.xlu0 %v218, 1
    %v592 = vpop.permute.xlu0 %591
    %593 = vrot.lane.b32.xlu0 %v220, 1
    %v594 = vpop.permute.xlu0 %593
    %595 = vrot.lane.b32.xlu0 %v222, 1
    %v596 = vpop.permute.xlu0 %595
    %597 = vrot.lane.b32.xlu0 %v224, 1
    %v598 = vpop.permute.xlu0 %597
    %599 = vrot.lane.b32.xlu0 %v226, 1
    %v600 = vpop.permute.xlu0 %599
    %601 = vrot.lane.b32.xlu0 %v228, 1
    %v602 = vpop.permute.xlu0 %601
    %603 = vrot.lane.b32.xlu0 %v219, 1
    %v604 = vpop.permute.xlu0 %603
    %605 = vrot.lane.b32.xlu0 %v221, 1
    %v606 = vpop.permute.xlu0 %605
    %607 = vrot.lane.b32.xlu0 %v223, 1
    %v608 = vpop.permute.xlu0 %607
    %609 = vrot.lane.b32.xlu0 %v225, 1
    %v610 = vpop.permute.xlu0 %609
    %611 = vrot.lane.b32.xlu0 %v227, 1
    %v612 = vpop.permute.xlu0 %611
    %613 = vrot.lane.b32.xlu0 %v229, 1
    %v614 = vpop.permute.xlu0 %613
    %vm615 = vcmp.lt.s32.totalorder %v48, 1
    %v616 = vsel %vm615, %v592, %v604
    %v617 = vsel %vm615, %v594, %v606
    %v618 = vsel %vm615, %v596, %v608
    %v619 = vsel %vm615, %v598, %v610
    %v620 = vsel %vm615, %v600, %v612
    %v621 = vsel %vm615, %v602, %v614
    %v622 = vsel %vm615, %v604, %v592
    %v623 = vsel %vm615, %v606, %v594
    %v624 = vsel %vm615, %v608, %v596
    %v625 = vsel %vm615, %v610, %v598
    %v626 = vsel %vm615, %v612, %v600
    %v627 = vsel %vm615, %v614, %v602
    %v628 = vsel %vm317, 1, 0
    %v629 = vsel %vm318, 1, 0
    %vm630 = vcmp.eq.s32.totalorder %v628, 1
    %vm631 = vcmp.eq.s32.totalorder %v629, 1
    %v632 = vsel %vm630, %v622, 0.0
    %v633 = vsel %vm631, %v616, 0.0
    %v634 = vsel %vm630, %v623, 0.0
    %v635 = vsel %vm631, %v617, 0.0
    %v636 = vsel %vm630, %v624, 0.0
    %v637 = vsel %vm631, %v618, 0.0
    %v638 = vsel %vm630, %v625, 0.0
    %v639 = vsel %vm631, %v619, 0.0
    %v640 = vsel %vm630, %v626, 0.0
    %v641 = vsel %vm631, %v620, 0.0
    %v642 = vsel %vm630, %v627, 0.0
    %v643 = vsel %vm631, %v621, 0.0
    %644 = vset.pattern.permute.xlu0 3
    %645 = vperm.xlu0 %644, %v230
    %v646 = vpop.permute.xlu0 %645
    %648 = vset.pattern.permute.xlu0 3
    %649 = vperm.xlu0 %648, %v231
    %v650 = vpop.permute.xlu0 %649
    %652 = vset.pattern.permute.xlu0 3
    %653 = vperm.xlu0 %652, %v232
    %v654 = vpop.permute.xlu0 %653
    %656 = vset.pattern.permute.xlu0 3
    %657 = vperm.xlu0 %656, %v233
    %v658 = vpop.permute.xlu0 %657
    %660 = vset.pattern.permute.xlu0 3
    %661 = vperm.xlu0 %660, %v234
    %v662 = vpop.permute.xlu0 %661
    %664 = vset.pattern.permute.xlu0 3
    %665 = vperm.xlu0 %664, %v235
    %v666 = vpop.permute.xlu0 %665
    %v668 = vmul.f32 %v632, %v646
    %v669 = vmul.f32 %v633, %v646
    %v670 = vmul.f32 %v634, %v650
    %v671 = vmul.f32 %v635, %v650
    %v672 = vmul.f32 %v636, %v654
    %v673 = vmul.f32 %v637, %v654
    %v674 = vmul.f32 %v638, %v658
    %v675 = vmul.f32 %v639, %v658
    %v676 = vmul.f32 %v640, %v662
    %v677 = vmul.f32 %v641, %v662
    %v678 = vmul.f32 %v642, %v666
    %v679 = vmul.f32 %v643, %v666
    %v680 = vadd.f32 %v579, %v668
    %v681 = vadd.f32 %v580, %v669
    %v682 = vadd.f32 %v581, %v670
    %v683 = vadd.f32 %v582, %v671
    %v684 = vadd.f32 %v583, %v672
    %v685 = vadd.f32 %v584, %v673
    %v686 = vadd.f32 %v585, %v674
    %v687 = vadd.f32 %v586, %v675
    %v688 = vadd.f32 %v587, %v676
    %v689 = vadd.f32 %v588, %v677
    %v690 = vadd.f32 %v589, %v678
    %v691 = vadd.f32 %v590, %v679
    %692 = vrot.lane.b32.xlu0 %v218, 127
    %v693 = vpop.permute.xlu0 %692
    %694 = vrot.lane.b32.xlu0 %v220, 127
    %v695 = vpop.permute.xlu0 %694
    %696 = vrot.lane.b32.xlu0 %v222, 127
    %v697 = vpop.permute.xlu0 %696
    %698 = vrot.lane.b32.xlu0 %v224, 127
    %v699 = vpop.permute.xlu0 %698
    %700 = vrot.lane.b32.xlu0 %v226, 127
    %v701 = vpop.permute.xlu0 %700
    %702 = vrot.lane.b32.xlu0 %v228, 127
    %v703 = vpop.permute.xlu0 %702
    %704 = vrot.lane.b32.xlu0 %v219, 127
    %v705 = vpop.permute.xlu0 %704
    %706 = vrot.lane.b32.xlu0 %v221, 127
    %v707 = vpop.permute.xlu0 %706
    %708 = vrot.lane.b32.xlu0 %v223, 127
    %v709 = vpop.permute.xlu0 %708
    %710 = vrot.lane.b32.xlu0 %v225, 127
    %v711 = vpop.permute.xlu0 %710
    %712 = vrot.lane.b32.xlu0 %v227, 127
    %v713 = vpop.permute.xlu0 %712
    %714 = vrot.lane.b32.xlu0 %v229, 127
    %v715 = vpop.permute.xlu0 %714
    %vm716 = vcmp.lt.s32.totalorder %v48, 127
    %v717 = vsel %vm716, %v693, %v705
    %v718 = vsel %vm716, %v695, %v707
    %v719 = vsel %vm716, %v697, %v709
    %v720 = vsel %vm716, %v699, %v711
    %v721 = vsel %vm716, %v701, %v713
    %v722 = vsel %vm716, %v703, %v715
    %v723 = vsel %vm716, %v705, %v693
    %v724 = vsel %vm716, %v707, %v695
    %v725 = vsel %vm716, %v709, %v697
    %v726 = vsel %vm716, %v711, %v699
    %v727 = vsel %vm716, %v713, %v701
    %v728 = vsel %vm716, %v715, %v703
    %v729 = vsel %vm523, 1, 0
    %v730 = vsel %vm524, 1, 0
    %vm731 = vcmp.eq.s32.totalorder %v729, 1
    %vm732 = vcmp.eq.s32.totalorder %v730, 1
    %v733 = vsel %vm731, %v717, 0.0
    %v734 = vsel %vm732, %v723, 0.0
    %v735 = vsel %vm731, %v718, 0.0
    %v736 = vsel %vm732, %v724, 0.0
    %v737 = vsel %vm731, %v719, 0.0
    %v738 = vsel %vm732, %v725, 0.0
    %v739 = vsel %vm731, %v720, 0.0
    %v740 = vsel %vm732, %v726, 0.0
    %v741 = vsel %vm731, %v721, 0.0
    %v742 = vsel %vm732, %v727, 0.0
    %v743 = vsel %vm731, %v722, 0.0
    %v744 = vsel %vm732, %v728, 0.0
    %745 = vset.pattern.permute.xlu0 5
    %746 = vperm.xlu0 %745, %v230
    %v747 = vpop.permute.xlu0 %746
    %749 = vset.pattern.permute.xlu0 5
    %750 = vperm.xlu0 %749, %v231
    %v751 = vpop.permute.xlu0 %750
    %753 = vset.pattern.permute.xlu0 5
    %754 = vperm.xlu0 %753, %v232
    %v755 = vpop.permute.xlu0 %754
    %757 = vset.pattern.permute.xlu0 5
    %758 = vperm.xlu0 %757, %v233
    %v759 = vpop.permute.xlu0 %758
    %761 = vset.pattern.permute.xlu0 5
    %762 = vperm.xlu0 %761, %v234
    %v763 = vpop.permute.xlu0 %762
    %765 = vset.pattern.permute.xlu0 5
    %766 = vperm.xlu0 %765, %v235
    %v767 = vpop.permute.xlu0 %766
    %v769 = vmul.f32 %v733, %v747
    %v770 = vmul.f32 %v734, %v747
    %v771 = vmul.f32 %v735, %v751
    %v772 = vmul.f32 %v736, %v751
    %v773 = vmul.f32 %v737, %v755
    %v774 = vmul.f32 %v738, %v755
    %v775 = vmul.f32 %v739, %v759
    %v776 = vmul.f32 %v740, %v759
    %v777 = vmul.f32 %v741, %v763
    %v778 = vmul.f32 %v742, %v763
    %v779 = vmul.f32 %v743, %v767
    %v780 = vmul.f32 %v744, %v767
    %v781 = vadd.f32 %v680, %v769
    %v782 = vadd.f32 %v681, %v770
    %v783 = vadd.f32 %v682, %v771
    %v784 = vadd.f32 %v683, %v772
    %v785 = vadd.f32 %v684, %v773
    %v786 = vadd.f32 %v685, %v774
    %v787 = vadd.f32 %v686, %v775
    %v788 = vadd.f32 %v687, %v776
    %v789 = vadd.f32 %v688, %v777
    %v790 = vadd.f32 %v689, %v778
    %v791 = vadd.f32 %v690, %v779
    %v792 = vadd.f32 %v691, %v780
    %793 = vrot.lane.b32.xlu0 %v218, 113
    %v794 = vpop.permute.xlu0 %793
    %795 = vrot.lane.b32.xlu0 %v220, 113
    %v796 = vpop.permute.xlu0 %795
    %797 = vrot.lane.b32.xlu0 %v222, 113
    %v798 = vpop.permute.xlu0 %797
    %799 = vrot.lane.b32.xlu0 %v224, 113
    %v800 = vpop.permute.xlu0 %799
    %801 = vrot.lane.b32.xlu0 %v226, 113
    %v802 = vpop.permute.xlu0 %801
    %803 = vrot.lane.b32.xlu0 %v228, 113
    %v804 = vpop.permute.xlu0 %803
    %805 = vrot.lane.b32.xlu0 %v219, 113
    %v806 = vpop.permute.xlu0 %805
    %807 = vrot.lane.b32.xlu0 %v221, 113
    %v808 = vpop.permute.xlu0 %807
    %809 = vrot.lane.b32.xlu0 %v223, 113
    %v810 = vpop.permute.xlu0 %809
    %811 = vrot.lane.b32.xlu0 %v225, 113
    %v812 = vpop.permute.xlu0 %811
    %813 = vrot.lane.b32.xlu0 %v227, 113
    %v814 = vpop.permute.xlu0 %813
    %815 = vrot.lane.b32.xlu0 %v229, 113
    %v816 = vpop.permute.xlu0 %815
    %vm817 = vcmp.lt.s32.totalorder %v48, 113
    %v818 = vsel %vm817, %v794, %v806
    %v819 = vsel %vm817, %v796, %v808
    %v820 = vsel %vm817, %v798, %v810
    %v821 = vsel %vm817, %v800, %v812
    %v822 = vsel %vm817, %v802, %v814
    %v823 = vsel %vm817, %v804, %v816
    %v824 = vsel %vm817, %v806, %v794
    %v825 = vsel %vm817, %v808, %v796
    %v826 = vsel %vm817, %v810, %v798
    %v827 = vsel %vm817, %v812, %v800
    %v828 = vsel %vm817, %v814, %v802
    %v829 = vsel %vm817, %v816, %v804
    %vm830 = vcmp.lt.s32.totalorder %v52, 15
    %vm831 = vcmp.lt.s32.totalorder %v53, 15
    %vm832 = vmand %vm830, %vm317
    %vm833 = vmand %vm831, %vm318
    %v834 = vsel %vm832, 1, 0
    %v835 = vsel %vm833, 1, 0
    %vm836 = vcmp.eq.s32.totalorder %v834, 1
    %vm837 = vcmp.eq.s32.totalorder %v835, 1
    %v838 = vsel %vm836, %v818, 0.0
    %v839 = vsel %vm837, %v824, 0.0
    %v840 = vsel %vm836, %v819, 0.0
    %v841 = vsel %vm837, %v825, 0.0
    %v842 = vsel %vm836, %v820, 0.0
    %v843 = vsel %vm837, %v826, 0.0
    %v844 = vsel %vm836, %v821, 0.0
    %v845 = vsel %vm837, %v827, 0.0
    %v846 = vsel %vm836, %v822, 0.0
    %v847 = vsel %vm837, %v828, 0.0
    %v848 = vsel %vm836, %v823, 0.0
    %v849 = vsel %vm837, %v829, 0.0
    %850 = vset.pattern.permute.xlu0 6
    %851 = vperm.xlu0 %850, %v230
    %v852 = vpop.permute.xlu0 %851
    %854 = vset.pattern.permute.xlu0 6
    %855 = vperm.xlu0 %854, %v231
    %v856 = vpop.permute.xlu0 %855
    %858 = vset.pattern.permute.xlu0 6
    %859 = vperm.xlu0 %858, %v232
    %v860 = vpop.permute.xlu0 %859
    %862 = vset.pattern.permute.xlu0 6
    %863 = vperm.xlu0 %862, %v233
    %v864 = vpop.permute.xlu0 %863
    %866 = vset.pattern.permute.xlu0 6
    %867 = vperm.xlu0 %866, %v234
    %v868 = vpop.permute.xlu0 %867
    %870 = vset.pattern.permute.xlu0 6
    %871 = vperm.xlu0 %870, %v235
    %v872 = vpop.permute.xlu0 %871
    %v874 = vmul.f32 %v838, %v852
    %v875 = vmul.f32 %v839, %v852
    %v876 = vmul.f32 %v840, %v856
    %v877 = vmul.f32 %v841, %v856
    %v878 = vmul.f32 %v842, %v860
    %v879 = vmul.f32 %v843, %v860
    %v880 = vmul.f32 %v844, %v864
    %v881 = vmul.f32 %v845, %v864
    %v882 = vmul.f32 %v846, %v868
    %v883 = vmul.f32 %v847, %v868
    %v884 = vmul.f32 %v848, %v872
    %v885 = vmul.f32 %v849, %v872
    %v886 = vadd.f32 %v781, %v874
    %v887 = vadd.f32 %v782, %v875
    %v888 = vadd.f32 %v783, %v876
    %v889 = vadd.f32 %v784, %v877
    %v890 = vadd.f32 %v785, %v878
    %v891 = vadd.f32 %v786, %v879
    %v892 = vadd.f32 %v787, %v880
    %v893 = vadd.f32 %v788, %v881
    %v894 = vadd.f32 %v789, %v882
    %v895 = vadd.f32 %v790, %v883
    %v896 = vadd.f32 %v791, %v884
    %v897 = vadd.f32 %v792, %v885
    %898 = vrot.lane.b32.xlu0 %v218, 112
    %v899 = vpop.permute.xlu0 %898
    %900 = vrot.lane.b32.xlu0 %v220, 112
    %v901 = vpop.permute.xlu0 %900
    %902 = vrot.lane.b32.xlu0 %v222, 112
    %v903 = vpop.permute.xlu0 %902
    %904 = vrot.lane.b32.xlu0 %v224, 112
    %v905 = vpop.permute.xlu0 %904
    %906 = vrot.lane.b32.xlu0 %v226, 112
    %v907 = vpop.permute.xlu0 %906
    %908 = vrot.lane.b32.xlu0 %v228, 112
    %v909 = vpop.permute.xlu0 %908
    %910 = vrot.lane.b32.xlu0 %v219, 112
    %v911 = vpop.permute.xlu0 %910
    %912 = vrot.lane.b32.xlu0 %v221, 112
    %v913 = vpop.permute.xlu0 %912
    %914 = vrot.lane.b32.xlu0 %v223, 112
    %v915 = vpop.permute.xlu0 %914
    %916 = vrot.lane.b32.xlu0 %v225, 112
    %v917 = vpop.permute.xlu0 %916
    %918 = vrot.lane.b32.xlu0 %v227, 112
    %v919 = vpop.permute.xlu0 %918
    %920 = vrot.lane.b32.xlu0 %v229, 112
    %v921 = vpop.permute.xlu0 %920
    %vm922 = vcmp.lt.s32.totalorder %v48, 112
    %v923 = vsel %vm922, %v899, %v911
    %v924 = vsel %vm922, %v901, %v913
    %v925 = vsel %vm922, %v903, %v915
    %v926 = vsel %vm922, %v905, %v917
    %v927 = vsel %vm922, %v907, %v919
    %v928 = vsel %vm922, %v909, %v921
    %v929 = vsel %vm922, %v911, %v899
    %v930 = vsel %vm922, %v913, %v901
    %v931 = vsel %vm922, %v915, %v903
    %v932 = vsel %vm922, %v917, %v905
    %v933 = vsel %vm922, %v919, %v907
    %v934 = vsel %vm922, %v921, %v909
    %v935 = vsel %vm830, 1, 0
    %v936 = vsel %vm831, 1, 0
    %vm937 = vcmp.eq.s32.totalorder %v935, 1
    %vm938 = vcmp.eq.s32.totalorder %v936, 1
    %v939 = vsel %vm937, %v923, 0.0
    %v940 = vsel %vm938, %v929, 0.0
    %v941 = vsel %vm937, %v924, 0.0
    %v942 = vsel %vm938, %v930, 0.0
    %v943 = vsel %vm937, %v925, 0.0
    %v944 = vsel %vm938, %v931, 0.0
    %v945 = vsel %vm937, %v926, 0.0
    %v946 = vsel %vm938, %v932, 0.0
    %v947 = vsel %vm937, %v927, 0.0
    %v948 = vsel %vm938, %v933, 0.0
    %v949 = vsel %vm937, %v928, 0.0
    %v950 = vsel %vm938, %v934, 0.0
    %951 = vset.pattern.permute.xlu0 7
    %952 = vperm.xlu0 %951, %v230
    %v953 = vpop.permute.xlu0 %952
    %955 = vset.pattern.permute.xlu0 7
    %956 = vperm.xlu0 %955, %v231
    %v957 = vpop.permute.xlu0 %956
    %959 = vset.pattern.permute.xlu0 7
    %960 = vperm.xlu0 %959, %v232
    %v961 = vpop.permute.xlu0 %960
    %963 = vset.pattern.permute.xlu0 7
    %964 = vperm.xlu0 %963, %v233
    %v965 = vpop.permute.xlu0 %964
    %967 = vset.pattern.permute.xlu0 7
    %968 = vperm.xlu0 %967, %v234
    %v969 = vpop.permute.xlu0 %968
    %971 = vset.pattern.permute.xlu0 7
    %972 = vperm.xlu0 %971, %v235
    %v973 = vpop.permute.xlu0 %972
    %v975 = vmul.f32 %v939, %v953
    %v976 = vmul.f32 %v940, %v953
    %v977 = vmul.f32 %v941, %v957
    %v978 = vmul.f32 %v942, %v957
    %v979 = vmul.f32 %v943, %v961
    %v980 = vmul.f32 %v944, %v961
    %v981 = vmul.f32 %v945, %v965
    %v982 = vmul.f32 %v946, %v965
    %v983 = vmul.f32 %v947, %v969
    %v984 = vmul.f32 %v948, %v969
    %v985 = vmul.f32 %v949, %v973
    %v986 = vmul.f32 %v950, %v973
    %v987 = vadd.f32 %v886, %v975
    %v988 = vadd.f32 %v887, %v976
    %v989 = vadd.f32 %v888, %v977
    %v990 = vadd.f32 %v889, %v978
    %v991 = vadd.f32 %v890, %v979
    %v992 = vadd.f32 %v891, %v980
    %v993 = vadd.f32 %v892, %v981
    %v994 = vadd.f32 %v893, %v982
    %v995 = vadd.f32 %v894, %v983
    %v996 = vadd.f32 %v895, %v984
    %v997 = vadd.f32 %v896, %v985
    %v998 = vadd.f32 %v897, %v986
    %999 = vrot.lane.b32.xlu0 %v218, 111
    %v1000 = vpop.permute.xlu0 %999
    %1001 = vrot.lane.b32.xlu0 %v220, 111
    %v1002 = vpop.permute.xlu0 %1001
    %1003 = vrot.lane.b32.xlu0 %v222, 111
    %v1004 = vpop.permute.xlu0 %1003
    %1005 = vrot.lane.b32.xlu0 %v224, 111
    %v1006 = vpop.permute.xlu0 %1005
    %1007 = vrot.lane.b32.xlu0 %v226, 111
    %v1008 = vpop.permute.xlu0 %1007
    %1009 = vrot.lane.b32.xlu0 %v228, 111
    %v1010 = vpop.permute.xlu0 %1009
    %1011 = vrot.lane.b32.xlu0 %v219, 111
    %v1012 = vpop.permute.xlu0 %1011
    %1013 = vrot.lane.b32.xlu0 %v221, 111
    %v1014 = vpop.permute.xlu0 %1013
    %1015 = vrot.lane.b32.xlu0 %v223, 111
    %v1016 = vpop.permute.xlu0 %1015
    %1017 = vrot.lane.b32.xlu0 %v225, 111
    %v1018 = vpop.permute.xlu0 %1017
    %1019 = vrot.lane.b32.xlu0 %v227, 111
    %v1020 = vpop.permute.xlu0 %1019
    %1021 = vrot.lane.b32.xlu0 %v229, 111
    %v1022 = vpop.permute.xlu0 %1021
    %vm1023 = vcmp.lt.s32.totalorder %v48, 111
    %v1024 = vsel %vm1023, %v1000, %v1012
    %v1025 = vsel %vm1023, %v1002, %v1014
    %v1026 = vsel %vm1023, %v1004, %v1016
    %v1027 = vsel %vm1023, %v1006, %v1018
    %v1028 = vsel %vm1023, %v1008, %v1020
    %v1029 = vsel %vm1023, %v1010, %v1022
    %v1030 = vsel %vm1023, %v1012, %v1000
    %v1031 = vsel %vm1023, %v1014, %v1002
    %v1032 = vsel %vm1023, %v1016, %v1004
    %v1033 = vsel %vm1023, %v1018, %v1006
    %v1034 = vsel %vm1023, %v1020, %v1008
    %v1035 = vsel %vm1023, %v1022, %v1010
    %vm1036 = vmand %vm830, %vm523
    %vm1037 = vmand %vm831, %vm524
    %v1038 = vsel %vm1036, 1, 0
    %v1039 = vsel %vm1037, 1, 0
    %vm1040 = vcmp.eq.s32.totalorder %v1038, 1
    %vm1041 = vcmp.eq.s32.totalorder %v1039, 1
    %v1042 = vsel %vm1040, %v1024, 0.0
    %v1043 = vsel %vm1041, %v1030, 0.0
    %v1044 = vsel %vm1040, %v1025, 0.0
    %v1045 = vsel %vm1041, %v1031, 0.0
    %v1046 = vsel %vm1040, %v1026, 0.0
    %v1047 = vsel %vm1041, %v1032, 0.0
    %v1048 = vsel %vm1040, %v1027, 0.0
    %v1049 = vsel %vm1041, %v1033, 0.0
    %v1050 = vsel %vm1040, %v1028, 0.0
    %v1051 = vsel %vm1041, %v1034, 0.0
    %v1052 = vsel %vm1040, %v1029, 0.0
    %v1053 = vsel %vm1041, %v1035, 0.0
    %1054 = vset.pattern.permute.xlu0 8
    %1055 = vperm.xlu0 %1054, %v230
    %v1056 = vpop.permute.xlu0 %1055
    %1058 = vset.pattern.permute.xlu0 8
    %1059 = vperm.xlu0 %1058, %v231
    %v1060 = vpop.permute.xlu0 %1059
    %1062 = vset.pattern.permute.xlu0 8
    %1063 = vperm.xlu0 %1062, %v232
    %v1064 = vpop.permute.xlu0 %1063
    %1066 = vset.pattern.permute.xlu0 8
    %1067 = vperm.xlu0 %1066, %v233
    %v1068 = vpop.permute.xlu0 %1067
    %1070 = vset.pattern.permute.xlu0 8
    %1071 = vperm.xlu0 %1070, %v234
    %v1072 = vpop.permute.xlu0 %1071
    %1074 = vset.pattern.permute.xlu0 8
    %1075 = vperm.xlu0 %1074, %v235
    %v1076 = vpop.permute.xlu0 %1075
    %v1078 = vmul.f32 %v1042, %v1056
    %v1079 = vmul.f32 %v1043, %v1056
    %v1080 = vmul.f32 %v1044, %v1060
    %v1081 = vmul.f32 %v1045, %v1060
    %v1082 = vmul.f32 %v1046, %v1064
    %v1083 = vmul.f32 %v1047, %v1064
    %v1084 = vmul.f32 %v1048, %v1068
    %v1085 = vmul.f32 %v1049, %v1068
    %v1086 = vmul.f32 %v1050, %v1072
    %v1087 = vmul.f32 %v1051, %v1072
    %v1088 = vmul.f32 %v1052, %v1076
    %v1089 = vmul.f32 %v1053, %v1076
    %v1090 = vadd.f32 %v987, %v1078
    %v1091 = vadd.f32 %v988, %v1079
    %v1092 = vadd.f32 %v989, %v1080
    %v1093 = vadd.f32 %v990, %v1081
    %v1094 = vadd.f32 %v991, %v1082
    %v1095 = vadd.f32 %v992, %v1083
    %v1096 = vadd.f32 %v993, %v1084
    %v1097 = vadd.f32 %v994, %v1085
    %v1098 = vadd.f32 %v995, %v1086
    %v1099 = vadd.f32 %v996, %v1087
    %v1100 = vadd.f32 %v997, %v1088
    %v1101 = vadd.f32 %v998, %v1089
    %1103 = vset.pattern.permute.xlu0 0
    %1104 = vperm.xlu0 %1103, %v40
    %v1105 = vpop.permute.xlu0 %1104
    %1108 = vset.pattern.permute.xlu0 0
    %1109 = vperm.xlu0 %1108, %v41
    %v1110 = vpop.permute.xlu0 %1109
    %1113 = vset.pattern.permute.xlu0 0
    %1114 = vperm.xlu0 %1113, %v42
    %v1115 = vpop.permute.xlu0 %1114
    %1118 = vset.pattern.permute.xlu0 0
    %1119 = vperm.xlu0 %1118, %v43
    %v1120 = vpop.permute.xlu0 %1119
    %1123 = vset.pattern.permute.xlu0 0
    %1124 = vperm.xlu0 %1123, %v44
    %v1125 = vpop.permute.xlu0 %1124
    %1128 = vset.pattern.permute.xlu0 0
    %1129 = vperm.xlu0 %1128, %v45
    %v1130 = vpop.permute.xlu0 %1129
    %v1132 = vadd.f32 %v1090, %v1105
    %v1133 = vadd.f32 %v1091, %v1105
    %v1134 = vadd.f32 %v1092, %v1110
    %v1135 = vadd.f32 %v1093, %v1110
    %v1136 = vadd.f32 %v1094, %v1115
    %v1137 = vadd.f32 %v1095, %v1115
    %v1138 = vadd.f32 %v1096, %v1120
    %v1139 = vadd.f32 %v1097, %v1120
    %v1140 = vadd.f32 %v1098, %v1125
    %v1141 = vadd.f32 %v1099, %v1125
    %v1142 = vadd.f32 %v1100, %v1130
    %v1143 = vadd.f32 %v1101, %v1130
    %v1144 = vmax.f32 %v1132, 0.0
    %v1145 = vmax.f32 %v1133, 0.0
    %v1146 = vmax.f32 %v1134, 0.0
    %v1147 = vmax.f32 %v1135, 0.0
    %v1148 = vmax.f32 %v1136, 0.0
    %v1149 = vmax.f32 %v1137, 0.0
    %v1150 = vmax.f32 %v1138, 0.0
    %v1151 = vmax.f32 %v1139, 0.0
    %v1152 = vmax.f32 %v1140, 0.0
    %v1153 = vmax.f32 %v1141, 0.0
    %v1154 = vmax.f32 %v1142, 0.0
    %v1155 = vmax.f32 %v1143, 0.0
    %v1156 = vmin.f32 %v1144, 6.0
    %v1157 = vmin.f32 %v1145, 6.0
    %v1158 = vmin.f32 %v1146, 6.0
    %v1159 = vmin.f32 %v1147, 6.0
    %v1160 = vmin.f32 %v1148, 6.0
    %v1161 = vmin.f32 %v1149, 6.0
    %v1162 = vmin.f32 %v1150, 6.0
    %v1163 = vmin.f32 %v1151, 6.0
    %v1164 = vmin.f32 %v1152, 6.0
    %v1165 = vmin.f32 %v1153, 6.0
    %v1166 = vmin.f32 %v1154, 6.0
    %v1167 = vmin.f32 %v1155, 6.0
    %1169 = vset.pattern.permute.xlu0 0
    %1170 = vperm.xlu0 %1169, %v46
    %v1171 = vpop.permute.xlu0 %1170
    %vm1173 = vcmask 392192
    %v1175 = vsel %vm1173, %v33, 0
    %1177 = vmatprep.subr.mxu0 %v1157
    %1178 = vmatpush1.msra.mxu0 %v1156
    %1179 = vmatprep.subr.mxu0 %v1159
    %1180 = vmatpush1.msra.mxu0 %v1158
    %1181 = vmatprep.subr.mxu0 %v1161
    %1182 = vmatpush1.msra.mxu0 %v1160
    %1183 = vmatprep.subr.mxu0 %v1163
    %1184 = vmatpush1.msra.mxu0 %v1162
    %1185 = vmatprep.subr.mxu0 %v1165
    %1186 = vmatpush1.msra.mxu0 %v1164
    %1187 = vmatprep.subr.mxu0 %v1167
    %1188 = vmatpush1.msra.mxu0 %v1166
    %1189 = vmatprep.subr.mxu0 0.0
    %1190 = vmatpush1.msra.mxu0 0.0
    %1191 = vmatprep.subr.mxu0 0.0
    %1192 = vmatpush1.msra.mxu0 0.0
    %1193 = vmatprep.subr.mxu0 0.0
    %1194 = vmatpush1.msra.mxu0 0.0
    %1195 = vmatprep.subr.mxu0 0.0
    %1196 = vmatpush1.msra.mxu0 0.0
    %1197 = vmatprep.subr.mxu0 0.0
    %1198 = vmatpush1.msra.mxu0 0.0
    %1199 = vmatprep.subr.mxu0 0.0
    %1200 = vmatpush1.msra.mxu0 0.0
    %1201 = vmatprep.subr.mxu0 0.0
    %1202 = vmatpush1.msra.mxu0 0.0
    %1203 = vmatprep.subr.mxu0 0.0
    %1204 = vmatpush1.msra.mxu0 0.0
    %1205 = vmatprep.subr.mxu0 0.0
    %1206 = vmatpush1.msra.mxu0 0.0
    %1207 = vmatprep.subr.mxu0 0.0
    %1208 = vmatpush1.msra.mxu0 0.0
    %1209 = vmatprep.subr.mxu0 0.0
    %1210 = vmatpush1.msra.mxu0 0.0
    %1211 = vmatprep.subr.mxu0 0.0
    %1212 = vmatpush1.msra.mxu0 0.0
    %1213 = vmatprep.subr.mxu0 0.0
    %1214 = vmatpush1.msra.mxu0 0.0
    %1215 = vmatprep.subr.mxu0 0.0
    %1216 = vmatpush1.msra.mxu0 0.0
    %1217 = vmatprep.subr.mxu0 0.0
    %1218 = vmatpush1.msra.mxu0 0.0
    %1219 = vmatprep.subr.mxu0 0.0
    %1220 = vmatpush1.msra.mxu0 0.0
    %1221 = vmatprep.subr.mxu0 0.0
    %1222 = vmatpush1.msra.mxu0 0.0
    %1223 = vmatprep.subr.mxu0 0.0
    %1224 = vmatpush1.msra.mxu0 0.0
    %1225 = vmatprep.subr.mxu0 0.0
    %1226 = vmatpush1.msra.mxu0 0.0
    %1227 = vmatprep.subr.mxu0 0.0
    %1228 = vmatpush1.msra.mxu0 0.0
    %1229 = vmatprep.subr.mxu0 0.0
    %1230 = vmatpush1.msra.mxu0 0.0
    %1231 = vmatprep.subr.mxu0 0.0
    %1232 = vmatpush1.msra.mxu0 0.0
    %1233 = vmatprep.subr.mxu0 0.0
    %1234 = vmatpush1.msra.mxu0 0.0
    %1235 = vmatprep.subr.mxu0 0.0
    %1236 = vmatpush1.msra.mxu0 0.0
    %1237 = vmatprep.subr.mxu0 0.0
    %1238 = vmatpush1.msra.mxu0 0.0
    %1239 = vmatprep.subr.mxu0 0.0
    %1240 = vmatpush1.msra.mxu0 0.0
    %1241 = vmatprep.mubr.f32.mxu0 0.0
    %1242 = vmatmul.mubr.f32.gmra.mrb[0].mxu0 %v1175
    %v1243 = vpop.f32.mrb[0].mxu0
    %v1244 = vadd.f32 %v1171, %v1243
    %v1245 = vpop.f32.mrb[0].mxu0
    %v1246 = vadd.f32 %v1171, %v1245
    %1247 = vdwg.mxu0
    %v1248 = vadd.f32 %v1244, %v54
    %v1249 = vadd.f32 %v1246, %v55
    %1250 = vst [vmem:[#allocation2] sm:$0xff] %v1248
    %1251 = vst [vmem:[#allocation2 + $0x8] sm:$0xff] %v1249
    %s1252 = scalar_lea.vmem %s0, 16
    %v1253 = vld [vmem:[%s1252] sm:$0xff]
    %v1254 = vld [vmem:[%s1252 + $0x8] sm:$0xff]
    %1255 = vmatprep.subr.mxu0 %v1254
    %1256 = vmatpush1.msra.mxu0 %v1253
    %1257 = vmatprep.subr.mxu0 0.0
    %1258 = vmatpush1.msra.mxu0 0.0
    %1259 = vmatprep.subr.mxu0 0.0
    %1260 = vmatpush1.msra.mxu0 0.0
    %1261 = vmatprep.subr.mxu0 0.0
    %1262 = vmatpush1.msra.mxu0 0.0
    %1263 = vmatprep.subr.mxu0 0.0
    %1264 = vmatpush1.msra.mxu0 0.0
    %1265 = vmatprep.subr.mxu0 0.0
    %1266 = vmatpush1.msra.mxu0 0.0
    %1267 = vmatprep.subr.mxu0 0.0
    %1268 = vmatpush1.msra.mxu0 0.0
    %1269 = vmatprep.subr.mxu0 0.0
    %1270 = vmatpush1.msra.mxu0 0.0
    %1271 = vmatprep.subr.mxu0 0.0
    %1272 = vmatpush1.msra.mxu0 0.0
    %1273 = vmatprep.subr.mxu0 0.0
    %1274 = vmatpush1.msra.mxu0 0.0
    %1275 = vmatprep.subr.mxu0 0.0
    %1276 = vmatpush1.msra.mxu0 0.0
    %1277 = vmatprep.subr.mxu0 0.0
    %1278 = vmatpush1.msra.mxu0 0.0
    %1279 = vmatprep.subr.mxu0 0.0
    %1280 = vmatpush1.msra.mxu0 0.0
    %1281 = vmatprep.subr.mxu0 0.0
    %1282 = vmatpush1.msra.mxu0 0.0
    %1283 = vmatprep.subr.mxu0 0.0
    %1284 = vmatpush1.msra.mxu0 0.0
    %1285 = vmatprep.subr.mxu0 0.0
    %1286 = vmatpush1.msra.mxu0 0.0
    %1287 = vmatprep.subr.mxu0 0.0
    %1288 = vmatpush1.msra.mxu0 0.0
    %1289 = vmatprep.subr.mxu0 0.0
    %1290 = vmatpush1.msra.mxu0 0.0
    %1291 = vmatprep.subr.mxu0 0.0
    %1292 = vmatpush1.msra.mxu0 0.0
    %1293 = vmatprep.subr.mxu0 0.0
    %1294 = vmatpush1.msra.mxu0 0.0
    %1295 = vmatprep.subr.mxu0 0.0
    %1296 = vmatpush1.msra.mxu0 0.0
    %1297 = vmatprep.subr.mxu0 0.0
    %1298 = vmatpush1.msra.mxu0 0.0
    %1299 = vmatprep.subr.mxu0 0.0
    %1300 = vmatpush1.msra.mxu0 0.0
    %1301 = vmatprep.subr.mxu0 0.0
    %1302 = vmatpush1.msra.mxu0 0.0
    %1303 = vmatprep.subr.mxu0 0.0
    %1304 = vmatpush1.msra.mxu0 0.0
    %1305 = vmatprep.subr.mxu0 0.0
    %1306 = vmatpush1.msra.mxu0 0.0
    %1307 = vmatprep.subr.mxu0 0.0
    %1308 = vmatpush1.msra.mxu0 0.0
    %1309 = vmatprep.subr.mxu0 0.0
    %1310 = vmatpush1.msra.mxu0 0.0
    %1311 = vmatprep.subr.mxu0 0.0
    %1312 = vmatpush1.msra.mxu0 0.0
    %1313 = vmatprep.subr.mxu0 0.0
    %1314 = vmatpush1.msra.mxu0 0.0
    %1315 = vmatprep.subr.mxu0 0.0
    %1316 = vmatpush1.msra.mxu0 0.0
    %1317 = vmatprep.subr.mxu0 0.0
    %1318 = vmatpush1.msra.mxu0 0.0
    %1319 = vmatprep.mubr.f32.mxu0 0.0
    %1320 = vmatmul.mubr.f32.gmra.mrb[0].mxu0 %v88
    %v1321 = vpop.f32.mrb[0].mxu0
    %v1322 = vadd.f32 %v59, %v1321
    %v1323 = vpop.f32.mrb[0].mxu0
    %v1324 = vadd.f32 %v59, %v1323
    %1325 = vmatprep.mubr.f32.mxu0 0.0
    %1326 = vmatmul.mubr.f32.gmra.mrb[0].mxu0 %v91
    %v1327 = vpop.f32.mrb[0].mxu0
    %v1328 = vadd.f32 %v64, %v1327
    %v1329 = vpop.f32.mrb[0].mxu0
    %v1330 = vadd.f32 %v64, %v1329
    %1331 = vmatprep.mubr.f32.mxu0 0.0
    %1332 = vmatmul.mubr.f32.gmra.mrb[0].mxu0 %v94
    %v1333 = vpop.f32.mrb[0].mxu0
    %v1334 = vadd.f32 %v69, %v1333
    %v1335 = vpop.f32.mrb[0].mxu0
    %v1336 = vadd.f32 %v69, %v1335
    %1337 = vmatprep.mubr.f32.mxu0 0.0
    %1338 = vmatmul.mubr.f32.gmra.mrb[0].mxu0 %v97
    %v1339 = vpop.f32.mrb[0].mxu0
    %v1340 = vadd.f32 %v74, %v1339
    %v1341 = vpop.f32.mrb[0].mxu0
    %v1342 = vadd.f32 %v74, %v1341
    %1343 = vmatprep.mubr.f32.mxu0 0.0
    %1344 = vmatmul.mubr.f32.gmra.mrb[0].mxu0 %v100
    %v1345 = vpop.f32.mrb[0].mxu0
    %v1346 = vadd.f32 %v79, %v1345
    %v1347 = vpop.f32.mrb[0].mxu0
    %v1348 = vadd.f32 %v79, %v1347
    %1349 = vmatprep.mubr.f32.mxu0 0.0
    %1350 = vmatmul.mubr.f32.gmra.mrb[0].mxu0 %v103
    %v1351 = vpop.f32.mrb[0].mxu0
    %v1352 = vadd.f32 %v84, %v1351
    %v1353 = vpop.f32.mrb[0].mxu0
    %v1354 = vadd.f32 %v84, %v1353
    %1355 = vdwg.mxu0
    %v1356 = vmax.f32 %v1322, 0.0
    %v1357 = vmax.f32 %v1324, 0.0
    %v1358 = vmax.f32 %v1328, 0.0
    %v1359 = vmax.f32 %v1330, 0.0
    %v1360 = vmax.f32 %v1334, 0.0
    %v1361 = vmax.f32 %v1336, 0.0
    %v1362 = vmax.f32 %v1340, 0.0
    %v1363 = vmax.f32 %v1342, 0.0
    %v1364 = vmax.f32 %v1346, 0.0
    %v1365 = vmax.f32 %v1348, 0.0
    %v1366 = vmax.f32 %v1352, 0.0
    %v1367 = vmax.f32 %v1354, 0.0
    %v1368 = vmin.f32 %v1356, 6.0
    %v1369 = vmin.f32 %v1357, 6.0
    %v1370 = vmin.f32 %v1358, 6.0
    %v1371 = vmin.f32 %v1359, 6.0
    %v1372 = vmin.f32 %v1360, 6.0
    %v1373 = vmin.f32 %v1361, 6.0
    %v1374 = vmin.f32 %v1362, 6.0
    %v1375 = vmin.f32 %v1363, 6.0
    %v1376 = vmin.f32 %v1364, 6.0
    %v1377 = vmin.f32 %v1365, 6.0
    %v1378 = vmin.f32 %v1366, 6.0
    %v1379 = vmin.f32 %v1367, 6.0
    %v1380 = vld [vmem:[%s3] sm:$0xff]
    %v1381 = vld [vmem:[%s3 + $0x8] sm:$0xff]
    %v1382 = vld [vmem:[%s3 + $0x10] sm:$0xff]
    %v1383 = vld [vmem:[%s3 + $0x18] sm:$0xff]
    %v1384 = vld [vmem:[%s3 + $0x20] sm:$0xff]
    %v1385 = vld [vmem:[%s3 + $0x28] sm:$0xff]
    %1387 = vset.pattern.permute.xlu0 4
    %1388 = vperm.xlu0 %1387, %v1380
    %v1389 = vpop.permute.xlu0 %1388
    %1392 = vset.pattern.permute.xlu0 4
    %1393 = vperm.xlu0 %1392, %v1381
    %v1394 = vpop.permute.xlu0 %1393
    %1397 = vset.pattern.permute.xlu0 4
    %1398 = vperm.xlu0 %1397, %v1382
    %v1399 = vpop.permute.xlu0 %1398
    %1402 = vset.pattern.permute.xlu0 4
    %1403 = vperm.xlu0 %1402, %v1383
    %v1404 = vpop.permute.xlu0 %1403
    %1407 = vset.pattern.permute.xlu0 4
    %1408 = vperm.xlu0 %1407, %v1384
    %v1409 = vpop.permute.xlu0 %1408
    %1412 = vset.pattern.permute.xlu0 4
    %1413 = vperm.xlu0 %1412, %v1385
    %v1414 = vpop.permute.xlu0 %1413
    %v1416 = vmul.f32 %v1368, %v1389
    %v1417 = vmul.f32 %v1369, %v1389
    %v1418 = vmul.f32 %v1370, %v1394
    %v1419 = vmul.f32 %v1371, %v1394
    %v1420 = vmul.f32 %v1372, %v1399
    %v1421 = vmul.f32 %v1373, %v1399
    %v1422 = vmul.f32 %v1374, %v1404
    %v1423 = vmul.f32 %v1375, %v1404
    %v1424 = vmul.f32 %v1376, %v1409
    %v1425 = vmul.f32 %v1377, %v1409
    %v1426 = vmul.f32 %v1378, %v1414
    %v1427 = vmul.f32 %v1379, %v1414
    %1428 = vrot.lane.b32.xlu0 %v1368, 17
    %v1429 = vpop.permute.xlu0 %1428
    %1430 = vrot.lane.b32.xlu0 %v1370, 17
    %v1431 = vpop.permute.xlu0 %1430
    %1432 = vrot.lane.b32.xlu0 %v1372, 17
    %v1433 = vpop.permute.xlu0 %1432
    %1434 = vrot.lane.b32.xlu0 %v1374, 17
    %v1435 = vpop.permute.xlu0 %1434
    %1436 = vrot.lane.b32.xlu0 %v1376, 17
    %v1437 = vpop.permute.xlu0 %1436
    %1438 = vrot.lane.b32.xlu0 %v1378, 17
    %v1439 = vpop.permute.xlu0 %1438
    %1440 = vrot.lane.b32.xlu0 %v1369, 17
    %v1441 = vpop.permute.xlu0 %1440
    %1442 = vrot.lane.b32.xlu0 %v1371, 17
    %v1443 = vpop.permute.xlu0 %1442
    %1444 = vrot.lane.b32.xlu0 %v1373, 17
    %v1445 = vpop.permute.xlu0 %1444
    %1446 = vrot.lane.b32.xlu0 %v1375, 17
    %v1447 = vpop.permute.xlu0 %1446
    %1448 = vrot.lane.b32.xlu0 %v1377, 17
    %v1449 = vpop.permute.xlu0 %1448
    %1450 = vrot.lane.b32.xlu0 %v1379, 17
    %v1451 = vpop.permute.xlu0 %1450
    %v1452 = vsel %vm302, %v1429, %v1441
    %v1453 = vsel %vm302, %v1431, %v1443
    %v1454 = vsel %vm302, %v1433, %v1445
    %v1455 = vsel %vm302, %v1435, %v1447
    %v1456 = vsel %vm302, %v1437, %v1449
    %v1457 = vsel %vm302, %v1439, %v1451
    %v1458 = vsel %vm302, %v1441, %v1429
    %v1459 = vsel %vm302, %v1443, %v1431
    %v1460 = vsel %vm302, %v1445, %v1433
    %v1461 = vsel %vm302, %v1447, %v1435
    %v1462 = vsel %vm302, %v1449, %v1437
    %v1463 = vsel %vm302, %v1451, %v1439
    %v1464 = vsel %vm323, %v1458, 0.0
    %v1465 = vsel %vm324, %v1452, 0.0
    %v1466 = vsel %vm323, %v1459, 0.0
    %v1467 = vsel %vm324, %v1453, 0.0
    %v1468 = vsel %vm323, %v1460, 0.0
    %v1469 = vsel %vm324, %v1454, 0.0
    %v1470 = vsel %vm323, %v1461, 0.0
    %v1471 = vsel %vm324, %v1455, 0.0
    %v1472 = vsel %vm323, %v1462, 0.0
    %v1473 = vsel %vm324, %v1456, 0.0
    %v1474 = vsel %vm323, %v1463, 0.0
    %v1475 = vsel %vm324, %v1457, 0.0
    %1476 = vset.pattern.permute.xlu0 0
    %1477 = vperm.xlu0 %1476, %v1380
    %v1478 = vpop.permute.xlu0 %1477
    %1480 = vset.pattern.permute.xlu0 0
    %1481 = vperm.xlu0 %1480, %v1381
    %v1482 = vpop.permute.xlu0 %1481
    %1484 = vset.pattern.permute.xlu0 0
    %1485 = vperm.xlu0 %1484, %v1382
    %v1486 = vpop.permute.xlu0 %1485
    %1488 = vset.pattern.permute.xlu0 0
    %1489 = vperm.xlu0 %1488, %v1383
    %v1490 = vpop.permute.xlu0 %1489
    %1492 = vset.pattern.permute.xlu0 0
    %1493 = vperm.xlu0 %1492, %v1384
    %v1494 = vpop.permute.xlu0 %1493
    %1496 = vset.pattern.permute.xlu0 0
    %1497 = vperm.xlu0 %1496, %v1385
    %v1498 = vpop.permute.xlu0 %1497
    %v1500 = vmul.f32 %v1464, %v1478
    %v1501 = vmul.f32 %v1465, %v1478
    %v1502 = vmul.f32 %v1466, %v1482
    %v1503 = vmul.f32 %v1467, %v1482
    %v1504 = vmul.f32 %v1468, %v1486
    %v1505 = vmul.f32 %v1469, %v1486
    %v1506 = vmul.f32 %v1470, %v1490
    %v1507 = vmul.f32 %v1471, %v1490
    %v1508 = vmul.f32 %v1472, %v1494
    %v1509 = vmul.f32 %v1473, %v1494
    %v1510 = vmul.f32 %v1474, %v1498
    %v1511 = vmul.f32 %v1475, %v1498
    %v1512 = vadd.f32 %v1416, %v1500
    %v1513 = vadd.f32 %v1417, %v1501
    %v1514 = vadd.f32 %v1418, %v1502
    %v1515 = vadd.f32 %v1419, %v1503
    %v1516 = vadd.f32 %v1420, %v1504
    %v1517 = vadd.f32 %v1421, %v1505
    %v1518 = vadd.f32 %v1422, %v1506
    %v1519 = vadd.f32 %v1423, %v1507
    %v1520 = vadd.f32 %v1424, %v1508
    %v1521 = vadd.f32 %v1425, %v1509
    %v1522 = vadd.f32 %v1426, %v1510
    %v1523 = vadd.f32 %v1427, %v1511
    %1524 = vrot.lane.b32.xlu0 %v1368, 16
    %v1525 = vpop.permute.xlu0 %1524
    %1526 = vrot.lane.b32.xlu0 %v1370, 16
    %v1527 = vpop.permute.xlu0 %1526
    %1528 = vrot.lane.b32.xlu0 %v1372, 16
    %v1529 = vpop.permute.xlu0 %1528
    %1530 = vrot.lane.b32.xlu0 %v1374, 16
    %v1531 = vpop.permute.xlu0 %1530
    %1532 = vrot.lane.b32.xlu0 %v1376, 16
    %v1533 = vpop.permute.xlu0 %1532
    %1534 = vrot.lane.b32.xlu0 %v1378, 16
    %v1535 = vpop.permute.xlu0 %1534
    %1536 = vrot.lane.b32.xlu0 %v1369, 16
    %v1537 = vpop.permute.xlu0 %1536
    %1538 = vrot.lane.b32.xlu0 %v1371, 16
    %v1539 = vpop.permute.xlu0 %1538
    %1540 = vrot.lane.b32.xlu0 %v1373, 16
    %v1541 = vpop.permute.xlu0 %1540
    %1542 = vrot.lane.b32.xlu0 %v1375, 16
    %v1543 = vpop.permute.xlu0 %1542
    %1544 = vrot.lane.b32.xlu0 %v1377, 16
    %v1545 = vpop.permute.xlu0 %1544
    %1546 = vrot.lane.b32.xlu0 %v1379, 16
    %v1547 = vpop.permute.xlu0 %1546
    %v1548 = vsel %vm409, %v1525, %v1537
    %v1549 = vsel %vm409, %v1527, %v1539
    %v1550 = vsel %vm409, %v1529, %v1541
    %v1551 = vsel %vm409, %v1531, %v1543
    %v1552 = vsel %vm409, %v1533, %v1545
    %v1553 = vsel %vm409, %v1535, %v1547
    %v1554 = vsel %vm409, %v1537, %v1525
    %v1555 = vsel %vm409, %v1539, %v1527
    %v1556 = vsel %vm409, %v1541, %v1529
    %v1557 = vsel %vm409, %v1543, %v1531
    %v1558 = vsel %vm409, %v1545, %v1533
    %v1559 = vsel %vm409, %v1547, %v1535
    %v1560 = vsel %vm424, %v1554, 0.0
    %v1561 = vsel %vm425, %v1548, 0.0
    %v1562 = vsel %vm424, %v1555, 0.0
    %v1563 = vsel %vm425, %v1549, 0.0
    %v1564 = vsel %vm424, %v1556, 0.0
    %v1565 = vsel %vm425, %v1550, 0.0
    %v1566 = vsel %vm424, %v1557, 0.0
    %v1567 = vsel %vm425, %v1551, 0.0
    %v1568 = vsel %vm424, %v1558, 0.0
    %v1569 = vsel %vm425, %v1552, 0.0
    %v1570 = vsel %vm424, %v1559, 0.0
    %v1571 = vsel %vm425, %v1553, 0.0
    %1572 = vset.pattern.permute.xlu0 1
    %1573 = vperm.xlu0 %1572, %v1380
    %v1574 = vpop.permute.xlu0 %1573
    %1576 = vset.pattern.permute.xlu0 1
    %1577 = vperm.xlu0 %1576, %v1381
    %v1578 = vpop.permute.xlu0 %1577
    %1580 = vset.pattern.permute.xlu0 1
    %1581 = vperm.xlu0 %1580, %v1382
    %v1582 = vpop.permute.xlu0 %1581
    %1584 = vset.pattern.permute.xlu0 1
    %1585 = vperm.xlu0 %1584, %v1383
    %v1586 = vpop.permute.xlu0 %1585
    %1588 = vset.pattern.permute.xlu0 1
    %1589 = vperm.xlu0 %1588, %v1384
    %v1590 = vpop.permute.xlu0 %1589
    %1592 = vset.pattern.permute.xlu0 1
    %1593 = vperm.xlu0 %1592, %v1385
    %v1594 = vpop.permute.xlu0 %1593
    %v1596 = vmul.f32 %v1560, %v1574
    %v1597 = vmul.f32 %v1561, %v1574
    %v1598 = vmul.f32 %v1562, %v1578
    %v1599 = vmul.f32 %v1563, %v1578
    %v1600 = vmul.f32 %v1564, %v1582
    %v1601 = vmul.f32 %v1565, %v1582
    %v1602 = vmul.f32 %v1566, %v1586
    %v1603 = vmul.f32 %v1567, %v1586
    %v1604 = vmul.f32 %v1568, %v1590
    %v1605 = vmul.f32 %v1569, %v1590
    %v1606 = vmul.f32 %v1570, %v1594
    %v1607 = vmul.f32 %v1571, %v1594
    %v1608 = vadd.f32 %v1512, %v1596
    %v1609 = vadd.f32 %v1513, %v1597
    %v1610 = vadd.f32 %v1514, %v1598
    %v1611 = vadd.f32 %v1515, %v1599
    %v1612 = vadd.f32 %v1516, %v1600
    %v1613 = vadd.f32 %v1517, %v1601
    %v1614 = vadd.f32 %v1518, %v1602
    %v1615 = vadd.f32 %v1519, %v1603
    %v1616 = vadd.f32 %v1520, %v1604
    %v1617 = vadd.f32 %v1521, %v1605
    %v1618 = vadd.f32 %v1522, %v1606
    %v1619 = vadd.f32 %v1523, %v1607
    %1620 = vrot.lane.b32.xlu0 %v1368, 15
    %v1621 = vpop.permute.xlu0 %1620
    %1622 = vrot.lane.b32.xlu0 %v1370, 15
    %v1623 = vpop.permute.xlu0 %1622
    %1624 = vrot.lane.b32.xlu0 %v1372, 15
    %v1625 = vpop.permute.xlu0 %1624
    %1626 = vrot.lane.b32.xlu0 %v1374, 15
    %v1627 = vpop.permute.xlu0 %1626
    %1628 = vrot.lane.b32.xlu0 %v1376, 15
    %v1629 = vpop.permute.xlu0 %1628
    %1630 = vrot.lane.b32.xlu0 %v1378, 15
    %v1631 = vpop.permute.xlu0 %1630
    %1632 = vrot.lane.b32.xlu0 %v1369, 15
    %v1633 = vpop.permute.xlu0 %1632
    %1634 = vrot.lane.b32.xlu0 %v1371, 15
    %v1635 = vpop.permute.xlu0 %1634
    %1636 = vrot.lane.b32.xlu0 %v1373, 15
    %v1637 = vpop.permute.xlu0 %1636
    %1638 = vrot.lane.b32.xlu0 %v1375, 15
    %v1639 = vpop.permute.xlu0 %1638
    %1640 = vrot.lane.b32.xlu0 %v1377, 15
    %v1641 = vpop.permute.xlu0 %1640
    %1642 = vrot.lane.b32.xlu0 %v1379, 15
    %v1643 = vpop.permute.xlu0 %1642
    %v1644 = vsel %vm510, %v1621, %v1633
    %v1645 = vsel %vm510, %v1623, %v1635
    %v1646 = vsel %vm510, %v1625, %v1637
    %v1647 = vsel %vm510, %v1627, %v1639
    %v1648 = vsel %vm510, %v1629, %v1641
    %v1649 = vsel %vm510, %v1631, %v1643
    %v1650 = vsel %vm510, %v1633, %v1621
    %v1651 = vsel %vm510, %v1635, %v1623
    %v1652 = vsel %vm510, %v1637, %v1625
    %v1653 = vsel %vm510, %v1639, %v1627
    %v1654 = vsel %vm510, %v1641, %v1629
    %v1655 = vsel %vm510, %v1643, %v1631
    %v1656 = vsel %vm529, %v1650, 0.0
    %v1657 = vsel %vm530, %v1644, 0.0
    %v1658 = vsel %vm529, %v1651, 0.0
    %v1659 = vsel %vm530, %v1645, 0.0
    %v1660 = vsel %vm529, %v1652, 0.0
    %v1661 = vsel %vm530, %v1646, 0.0
    %v1662 = vsel %vm529, %v1653, 0.0
    %v1663 = vsel %vm530, %v1647, 0.0
    %v1664 = vsel %vm529, %v1654, 0.0
    %v1665 = vsel %vm530, %v1648, 0.0
    %v1666 = vsel %vm529, %v1655, 0.0
    %v1667 = vsel %vm530, %v1649, 0.0
    %1668 = vset.pattern.permute.xlu0 2
    %1669 = vperm.xlu0 %1668, %v1380
    %v1670 = vpop.permute.xlu0 %1669
    %1672 = vset.pattern.permute.xlu0 2
    %1673 = vperm.xlu0 %1672, %v1381
    %v1674 = vpop.permute.xlu0 %1673
    %1676 = vset.pattern.permute.xlu0 2
    %1677 = vperm.xlu0 %1676, %v1382
    %v1678 = vpop.permute.xlu0 %1677
    %1680 = vset.pattern.permute.xlu0 2
    %1681 = vperm.xlu0 %1680, %v1383
    %v1682 = vpop.permute.xlu0 %1681
    %1684 = vset.pattern.permute.xlu0 2
    %1685 = vperm.xlu0 %1684, %v1384
    %v1686 = vpop.permute.xlu0 %1685
    %1688 = vset.pattern.permute.xlu0 2
    %1689 = vperm.xlu0 %1688, %v1385
    %v1690 = vpop.permute.xlu0 %1689
    %v1692 = vmul.f32 %v1656, %v1670
    %v1693 = vmul.f32 %v1657, %v1670
    %v1694 = vmul.f32 %v1658, %v1674
    %v1695 = vmul.f32 %v1659, %v1674
    %v1696 = vmul.f32 %v1660, %v1678
    %v1697 = vmul.f32 %v1661, %v1678
    %v1698 = vmul.f32 %v1662, %v1682
    %v1699 = vmul.f32 %v1663, %v1682
    %v1700 = vmul.f32 %v1664, %v1686
    %v1701 = vmul.f32 %v1665, %v1686
    %v1702 = vmul.f32 %v1666, %v1690
    %v1703 = vmul.f32 %v1667, %v1690
    %v1704 = vadd.f32 %v1608, %v1692
    %v1705 = vadd.f32 %v1609, %v1693
    %v1706 = vadd.f32 %v1610, %v1694
    %v1707 = vadd.f32 %v1611, %v1695
    %v1708 = vadd.f32 %v1612, %v1696
    %v1709 = vadd.f32 %v1613, %v1697
    %v1710 = vadd.f32 %v1614, %v1698
    %v1711 = vadd.f32 %v1615, %v1699
    %v1712 = vadd.f32 %v1616, %v1700
    %v1713 = vadd.f32 %v1617, %v1701
    %v1714 = vadd.f32 %v1618, %v1702
    %v1715 = vadd.f32 %v1619, %v1703
    %1716 = vrot.lane.b32.xlu0 %v1368, 1
    %v1717 = vpop.permute.xlu0 %1716
    %1718 = vrot.lane.b32.xlu0 %v1370, 1
    %v1719 = vpop.permute.xlu0 %1718
    %1720 = vrot.lane.b32.xlu0 %v1372, 1
    %v1721 = vpop.permute.xlu0 %1720
    %1722 = vrot.lane.b32.xlu0 %v1374, 1
    %v1723 = vpop.permute.xlu0 %1722
    %1724 = vrot.lane.b32.xlu0 %v1376, 1
    %v1725 = vpop.permute.xlu0 %1724
    %1726 = vrot.lane.b32.xlu0 %v1378, 1
    %v1727 = vpop.permute.xlu0 %1726
    %1728 = vrot.lane.b32.xlu0 %v1369, 1
    %v1729 = vpop.permute.xlu0 %1728
    %1730 = vrot.lane.b32.xlu0 %v1371, 1
    %v1731 = vpop.permute.xlu0 %1730
    %1732 = vrot.lane.b32.xlu0 %v1373, 1
    %v1733 = vpop.permute.xlu0 %1732
    %1734 = vrot.lane.b32.xlu0 %v1375, 1
    %v1735 = vpop.permute.xlu0 %1734
    %1736 = vrot.lane.b32.xlu0 %v1377, 1
    %v1737 = vpop.permute.xlu0 %1736
    %1738 = vrot.lane.b32.xlu0 %v1379, 1
    %v1739 = vpop.permute.xlu0 %1738
    %v1740 = vsel %vm615, %v1717, %v1729
    %v1741 = vsel %vm615, %v1719, %v1731
    %v1742 = vsel %vm615, %v1721, %v1733
    %v1743 = vsel %vm615, %v1723, %v1735
    %v1744 = vsel %vm615, %v1725, %v1737
    %v1745 = vsel %vm615, %v1727, %v1739
    %v1746 = vsel %vm615, %v1729, %v1717
    %v1747 = vsel %vm615, %v1731, %v1719
    %v1748 = vsel %vm615, %v1733, %v1721
    %v1749 = vsel %vm615, %v1735, %v1723
    %v1750 = vsel %vm615, %v1737, %v1725
    %v1751 = vsel %vm615, %v1739, %v1727
    %v1752 = vsel %vm630, %v1746, 0.0
    %v1753 = vsel %vm631, %v1740, 0.0
    %v1754 = vsel %vm630, %v1747, 0.0
    %v1755 = vsel %vm631, %v1741, 0.0
    %v1756 = vsel %vm630, %v1748, 0.0
    %v1757 = vsel %vm631, %v1742, 0.0
    %v1758 = vsel %vm630, %v1749, 0.0
    %v1759 = vsel %vm631, %v1743, 0.0
    %v1760 = vsel %vm630, %v1750, 0.0
    %v1761 = vsel %vm631, %v1744, 0.0
    %v1762 = vsel %vm630, %v1751, 0.0
    %v1763 = vsel %vm631, %v1745, 0.0
    %1764 = vset.pattern.permute.xlu0 3
    %1765 = vperm.xlu0 %1764, %v1380
    %v1766 = vpop.permute.xlu0 %1765
    %1768 = vset.pattern.permute.xlu0 3
    %1769 = vperm.xlu0 %1768, %v1381
    %v1770 = vpop.permute.xlu0 %1769
    %1772 = vset.pattern.permute.xlu0 3
    %1773 = vperm.xlu0 %1772, %v1382
    %v1774 = vpop.permute.xlu0 %1773
    %1776 = vset.pattern.permute.xlu0 3
    %1777 = vperm.xlu0 %1776, %v1383
    %v1778 = vpop.permute.xlu0 %1777
    %1780 = vset.pattern.permute.xlu0 3
    %1781 = vperm.xlu0 %1780, %v1384
    %v1782 = vpop.permute.xlu0 %1781
    %1784 = vset.pattern.permute.xlu0 3
    %1785 = vperm.xlu0 %1784, %v1385
    %v1786 = vpop.permute.xlu0 %1785
    %v1788 = vmul.f32 %v1752, %v1766
    %v1789 = vmul.f32 %v1753, %v1766
    %v1790 = vmul.f32 %v1754, %v1770
    %v1791 = vmul.f32 %v1755, %v1770
    %v1792 = vmul.f32 %v1756, %v1774
    %v1793 = vmul.f32 %v1757, %v1774
    %v1794 = vmul.f32 %v1758, %v1778
    %v1795 = vmul.f32 %v1759, %v1778
    %v1796 = vmul.f32 %v1760, %v1782
    %v1797 = vmul.f32 %v1761, %v1782
    %v1798 = vmul.f32 %v1762, %v1786
    %v1799 = vmul.f32 %v1763, %v1786
    %v1800 = vadd.f32 %v1704, %v1788
    %v1801 = vadd.f32 %v1705, %v1789
    %v1802 = vadd.f32 %v1706, %v1790
    %v1803 = vadd.f32 %v1707, %v1791
    %v1804 = vadd.f32 %v1708, %v1792
    %v1805 = vadd.f32 %v1709, %v1793
    %v1806 = vadd.f32 %v1710, %v1794
    %v1807 = vadd.f32 %v1711, %v1795
    %v1808 = vadd.f32 %v1712, %v1796
    %v1809 = vadd.f32 %v1713, %v1797
    %v1810 = vadd.f32 %v1714, %v1798
    %v1811 = vadd.f32 %v1715, %v1799
    %1812 = vrot.lane.b32.xlu0 %v1368, 127
    %v1813 = vpop.permute.xlu0 %1812
    %1814 = vrot.lane.b32.xlu0 %v1370, 127
    %v1815 = vpop.permute.xlu0 %1814
    %1816 = vrot.lane.b32.xlu0 %v1372, 127
    %v1817 = vpop.permute.xlu0 %1816
    %1818 = vrot.lane.b32.xlu0 %v1374, 127
    %v1819 = vpop.permute.xlu0 %1818
    %1820 = vrot.lane.b32.xlu0 %v1376, 127
    %v1821 = vpop.permute.xlu0 %1820
    %1822 = vrot.lane.b32.xlu0 %v1378, 127
    %v1823 = vpop.permute.xlu0 %1822
    %1824 = vrot.lane.b32.xlu0 %v1369, 127
    %v1825 = vpop.permute.xlu0 %1824
    %1826 = vrot.lane.b32.xlu0 %v1371, 127
    %v1827 = vpop.permute.xlu0 %1826
    %1828 = vrot.lane.b32.xlu0 %v1373, 127
    %v1829 = vpop.permute.xlu0 %1828
    %1830 = vrot.lane.b32.xlu0 %v1375, 127
    %v1831 = vpop.permute.xlu0 %1830
    %1832 = vrot.lane.b32.xlu0 %v1377, 127
    %v1833 = vpop.permute.xlu0 %1832
    %1834 = vrot.lane.b32.xlu0 %v1379, 127
    %v1835 = vpop.permute.xlu0 %1834
    %v1836 = vsel %vm716, %v1813, %v1825
    %v1837 = vsel %vm716, %v1815, %v1827
    %v1838 = vsel %vm716, %v1817, %v1829
    %v1839 = vsel %vm716, %v1819, %v1831
    %v1840 = vsel %vm716, %v1821, %v1833
    %v1841 = vsel %vm716, %v1823, %v1835
    %v1842 = vsel %vm716, %v1825, %v1813
    %v1843 = vsel %vm716, %v1827, %v1815
    %v1844 = vsel %vm716, %v1829, %v1817
    %v1845 = vsel %vm716, %v1831, %v1819
    %v1846 = vsel %vm716, %v1833, %v1821
    %v1847 = vsel %vm716, %v1835, %v1823
    %v1848 = vsel %vm731, %v1836, 0.0
    %v1849 = vsel %vm732, %v1842, 0.0
    %v1850 = vsel %vm731, %v1837, 0.0
    %v1851 = vsel %vm732, %v1843, 0.0
    %v1852 = vsel %vm731, %v1838, 0.0
    %v1853 = vsel %vm732, %v1844, 0.0
    %v1854 = vsel %vm731, %v1839, 0.0
    %v1855 = vsel %vm732, %v1845, 0.0
    %v1856 = vsel %vm731, %v1840, 0.0
    %v1857 = vsel %vm732, %v1846, 0.0
    %v1858 = vsel %vm731, %v1841, 0.0
    %v1859 = vsel %vm732, %v1847, 0.0
    %1860 = vset.pattern.permute.xlu0 5
    %1861 = vperm.xlu0 %1860, %v1380
    %v1862 = vpop.permute.xlu0 %1861
    %1864 = vset.pattern.permute.xlu0 5
    %1865 = vperm.xlu0 %1864, %v1381
    %v1866 = vpop.permute.xlu0 %1865
    %1868 = vset.pattern.permute.xlu0 5
    %1869 = vperm.xlu0 %1868, %v1382
    %v1870 = vpop.permute.xlu0 %1869
    %1872 = vset.pattern.permute.xlu0 5
    %1873 = vperm.xlu0 %1872, %v1383
    %v1874 = vpop.permute.xlu0 %1873
    %1876 = vset.pattern.permute.xlu0 5
    %1877 = vperm.xlu0 %1876, %v1384
    %v1878 = vpop.permute.xlu0 %1877
    %1880 = vset.pattern.permute.xlu0 5
    %1881 = vperm.xlu0 %1880, %v1385
    %v1882 = vpop.permute.xlu0 %1881
    %v1884 = vmul.f32 %v1848, %v1862
    %v1885 = vmul.f32 %v1849, %v1862
    %v1886 = vmul.f32 %v1850, %v1866
    %v1887 = vmul.f32 %v1851, %v1866
    %v1888 = vmul.f32 %v1852, %v1870
    %v1889 = vmul.f32 %v1853, %v1870
    %v1890 = vmul.f32 %v1854, %v1874
    %v1891 = vmul.f32 %v1855, %v1874
    %v1892 = vmul.f32 %v1856, %v1878
    %v1893 = vmul.f32 %v1857, %v1878
    %v1894 = vmul.f32 %v1858, %v1882
    %v1895 = vmul.f32 %v1859, %v1882
    %v1896 = vadd.f32 %v1800, %v1884
    %v1897 = vadd.f32 %v1801, %v1885
    %v1898 = vadd.f32 %v1802, %v1886
    %v1899 = vadd.f32 %v1803, %v1887
    %v1900 = vadd.f32 %v1804, %v1888
    %v1901 = vadd.f32 %v1805, %v1889
    %v1902 = vadd.f32 %v1806, %v1890
    %v1903 = vadd.f32 %v1807, %v1891
    %v1904 = vadd.f32 %v1808, %v1892
    %v1905 = vadd.f32 %v1809, %v1893
    %v1906 = vadd.f32 %v1810, %v1894
    %v1907 = vadd.f32 %v1811, %v1895
    %1908 = vrot.lane.b32.xlu0 %v1368, 113
    %v1909 = vpop.permute.xlu0 %1908
    %1910 = vrot.lane.b32.xlu0 %v1370, 113
    %v1911 = vpop.permute.xlu0 %1910
    %1912 = vrot.lane.b32.xlu0 %v1372, 113
    %v1913 = vpop.permute.xlu0 %1912
    %1914 = vrot.lane.b32.xlu0 %v1374, 113
    %v1915 = vpop.permute.xlu0 %1914
    %1916 = vrot.lane.b32.xlu0 %v1376, 113
    %v1917 = vpop.permute.xlu0 %1916
    %1918 = vrot.lane.b32.xlu0 %v1378, 113
    %v1919 = vpop.permute.xlu0 %1918
    %1920 = vrot.lane.b32.xlu0 %v1369, 113
    %v1921 = vpop.permute.xlu0 %1920
    %1922 = vrot.lane.b32.xlu0 %v1371, 113
    %v1923 = vpop.permute.xlu0 %1922
    %1924 = vrot.lane.b32.xlu0 %v1373, 113
    %v1925 = vpop.permute.xlu0 %1924
    %1926 = vrot.lane.b32.xlu0 %v1375, 113
    %v1927 = vpop.permute.xlu0 %1926
    %1928 = vrot.lane.b32.xlu0 %v1377, 113
    %v1929 = vpop.permute.xlu0 %1928
    %1930 = vrot.lane.b32.xlu0 %v1379, 113
    %v1931 = vpop.permute.xlu0 %1930
    %v1932 = vsel %vm817, %v1909, %v1921
    %v1933 = vsel %vm817, %v1911, %v1923
    %v1934 = vsel %vm817, %v1913, %v1925
    %v1935 = vsel %vm817, %v1915, %v1927
    %v1936 = vsel %vm817, %v1917, %v1929
    %v1937 = vsel %vm817, %v1919, %v1931
    %v1938 = vsel %vm817, %v1921, %v1909
    %v1939 = vsel %vm817, %v1923, %v1911
    %v1940 = vsel %vm817, %v1925, %v1913
    %v1941 = vsel %vm817, %v1927, %v1915
    %v1942 = vsel %vm817, %v1929, %v1917
    %v1943 = vsel %vm817, %v1931, %v1919
    %v1944 = vsel %vm836, %v1932, 0.0
    %v1945 = vsel %vm837, %v1938, 0.0
    %v1946 = vsel %vm836, %v1933, 0.0
    %v1947 = vsel %vm837, %v1939, 0.0
    %v1948 = vsel %vm836, %v1934, 0.0
    %v1949 = vsel %vm837, %v1940, 0.0
    %v1950 = vsel %vm836, %v1935, 0.0
    %v1951 = vsel %vm837, %v1941, 0.0
    %v1952 = vsel %vm836, %v1936, 0.0
    %v1953 = vsel %vm837, %v1942, 0.0
    %v1954 = vsel %vm836, %v1937, 0.0
    %v1955 = vsel %vm837, %v1943, 0.0
    %1956 = vset.pattern.permute.xlu0 6
    %1957 = vperm.xlu0 %1956, %v1380
    %v1958 = vpop.permute.xlu0 %1957
    %1960 = vset.pattern.permute.xlu0 6
    %1961 = vperm.xlu0 %1960, %v1381
    %v1962 = vpop.permute.xlu0 %1961
    %1964 = vset.pattern.permute.xlu0 6
    %1965 = vperm.xlu0 %1964, %v1382
    %v1966 = vpop.permute.xlu0 %1965
    %1968 = vset.pattern.permute.xlu0 6
    %1969 = vperm.xlu0 %1968, %v1383
    %v1970 = vpop.permute.xlu0 %1969
    %1972 = vset.pattern.permute.xlu0 6
    %1973 = vperm.xlu0 %1972, %v1384
    %v1974 = vpop.permute.xlu0 %1973
    %1976 = vset.pattern.permute.xlu0 6
    %1977 = vperm.xlu0 %1976, %v1385
    %v1978 = vpop.permute.xlu0 %1977
    %v1980 = vmul.f32 %v1944, %v1958
    %v1981 = vmul.f32 %v1945, %v1958
    %v1982 = vmul.f32 %v1946, %v1962
    %v1983 = vmul.f32 %v1947, %v1962
    %v1984 = vmul.f32 %v1948, %v1966
    %v1985 = vmul.f32 %v1949, %v1966
    %v1986 = vmul.f32 %v1950, %v1970
    %v1987 = vmul.f32 %v1951, %v1970
    %v1988 = vmul.f32 %v1952, %v1974
    %v1989 = vmul.f32 %v1953, %v1974
    %v1990 = vmul.f32 %v1954, %v1978
    %v1991 = vmul.f32 %v1955, %v1978
    %v1992 = vadd.f32 %v1896, %v1980
    %v1993 = vadd.f32 %v1897, %v1981
    %v1994 = vadd.f32 %v1898, %v1982
    %v1995 = vadd.f32 %v1899, %v1983
    %v1996 = vadd.f32 %v1900, %v1984
    %v1997 = vadd.f32 %v1901, %v1985
    %v1998 = vadd.f32 %v1902, %v1986
    %v1999 = vadd.f32 %v1903, %v1987
    %v2000 = vadd.f32 %v1904, %v1988
    %v2001 = vadd.f32 %v1905, %v1989
    %v2002 = vadd.f32 %v1906, %v1990
    %v2003 = vadd.f32 %v1907, %v1991
    %2004 = vrot.lane.b32.xlu0 %v1368, 112
    %v2005 = vpop.permute.xlu0 %2004
    %2006 = vrot.lane.b32.xlu0 %v1370, 112
    %v2007 = vpop.permute.xlu0 %2006
    %2008 = vrot.lane.b32.xlu0 %v1372, 112
    %v2009 = vpop.permute.xlu0 %2008
    %2010 = vrot.lane.b32.xlu0 %v1374, 112
    %v2011 = vpop.permute.xlu0 %2010
    %2012 = vrot.lane.b32.xlu0 %v1376, 112
    %v2013 = vpop.permute.xlu0 %2012
    %2014 = vrot.lane.b32.xlu0 %v1378, 112
    %v2015 = vpop.permute.xlu0 %2014
    %2016 = vrot.lane.b32.xlu0 %v1369, 112
    %v2017 = vpop.permute.xlu0 %2016
    %2018 = vrot.lane.b32.xlu0 %v1371, 112
    %v2019 = vpop.permute.xlu0 %2018
    %2020 = vrot.lane.b32.xlu0 %v1373, 112
    %v2021 = vpop.permute.xlu0 %2020
    %2022 = vrot.lane.b32.xlu0 %v1375, 112
    %v2023 = vpop.permute.xlu0 %2022
    %2024 = vrot.lane.b32.xlu0 %v1377, 112
    %v2025 = vpop.permute.xlu0 %2024
    %2026 = vrot.lane.b32.xlu0 %v1379, 112
    %v2027 = vpop.permute.xlu0 %2026
    %v2028 = vsel %vm922, %v2005, %v2017
    %v2029 = vsel %vm922, %v2007, %v2019
    %v2030 = vsel %vm922, %v2009, %v2021
    %v2031 = vsel %vm922, %v2011, %v2023
    %v2032 = vsel %vm922, %v2013, %v2025
    %v2033 = vsel %vm922, %v2015, %v2027
    %v2034 = vsel %vm922, %v2017, %v2005
    %v2035 = vsel %vm922, %v2019, %v2007
    %v2036 = vsel %vm922, %v2021, %v2009
    %v2037 = vsel %vm922, %v2023, %v2011
    %v2038 = vsel %vm922, %v2025, %v2013
    %v2039 = vsel %vm922, %v2027, %v2015
    %v2040 = vsel %vm937, %v2028, 0.0
    %v2041 = vsel %vm938, %v2034, 0.0
    %v2042 = vsel %vm937, %v2029, 0.0
    %v2043 = vsel %vm938, %v2035, 0.0
    %v2044 = vsel %vm937, %v2030, 0.0
    %v2045 = vsel %vm938, %v2036, 0.0
    %v2046 = vsel %vm937, %v2031, 0.0
    %v2047 = vsel %vm938, %v2037, 0.0
    %v2048 = vsel %vm937, %v2032, 0.0
    %v2049 = vsel %vm938, %v2038, 0.0
    %v2050 = vsel %vm937, %v2033, 0.0
    %v2051 = vsel %vm938, %v2039, 0.0
    %2052 = vset.pattern.permute.xlu0 7
    %2053 = vperm.xlu0 %2052, %v1380
    %v2054 = vpop.permute.xlu0 %2053
    %2056 = vset.pattern.permute.xlu0 7
    %2057 = vperm.xlu0 %2056, %v1381
    %v2058 = vpop.permute.xlu0 %2057
    %2060 = vset.pattern.permute.xlu0 7
    %2061 = vperm.xlu0 %2060, %v1382
    %v2062 = vpop.permute.xlu0 %2061
    %2064 = vset.pattern.permute.xlu0 7
    %2065 = vperm.xlu0 %2064, %v1383
    %v2066 = vpop.permute.xlu0 %2065
    %2068 = vset.pattern.permute.xlu0 7
    %2069 = vperm.xlu0 %2068, %v1384
    %v2070 = vpop.permute.xlu0 %2069
    %2072 = vset.pattern.permute.xlu0 7
    %2073 = vperm.xlu0 %2072, %v1385
    %v2074 = vpop.permute.xlu0 %2073
    %v2076 = vmul.f32 %v2040, %v2054
    %v2077 = vmul.f32 %v2041, %v2054
    %v2078 = vmul.f32 %v2042, %v2058
    %v2079 = vmul.f32 %v2043, %v2058
    %v2080 = vmul.f32 %v2044, %v2062
    %v2081 = vmul.f32 %v2045, %v2062
    %v2082 = vmul.f32 %v2046, %v2066
    %v2083 = vmul.f32 %v2047, %v2066
    %v2084 = vmul.f32 %v2048, %v2070
    %v2085 = vmul.f32 %v2049, %v2070
    %v2086 = vmul.f32 %v2050, %v2074
    %v2087 = vmul.f32 %v2051, %v2074
    %v2088 = vadd.f32 %v1992, %v2076
    %v2089 = vadd.f32 %v1993, %v2077
    %v2090 = vadd.f32 %v1994, %v2078
    %v2091 = vadd.f32 %v1995, %v2079
    %v2092 = vadd.f32 %v1996, %v2080
    %v2093 = vadd.f32 %v1997, %v2081
    %v2094 = vadd.f32 %v1998, %v2082
    %v2095 = vadd.f32 %v1999, %v2083
    %v2096 = vadd.f32 %v2000, %v2084
    %v2097 = vadd.f32 %v2001, %v2085
    %v2098 = vadd.f32 %v2002, %v2086
    %v2099 = vadd.f32 %v2003, %v2087
    %2100 = vrot.lane.b32.xlu0 %v1368, 111
    %v2101 = vpop.permute.xlu0 %2100
    %2102 = vrot.lane.b32.xlu0 %v1370, 111
    %v2103 = vpop.permute.xlu0 %2102
    %2104 = vrot.lane.b32.xlu0 %v1372, 111
    %v2105 = vpop.permute.xlu0 %2104
    %2106 = vrot.lane.b32.xlu0 %v1374, 111
    %v2107 = vpop.permute.xlu0 %2106
    %2108 = vrot.lane.b32.xlu0 %v1376, 111
    %v2109 = vpop.permute.xlu0 %2108
    %2110 = vrot.lane.b32.xlu0 %v1378, 111
    %v2111 = vpop.permute.xlu0 %2110
    %2112 = vrot.lane.b32.xlu0 %v1369, 111
    %v2113 = vpop.permute.xlu0 %2112
    %2114 = vrot.lane.b32.xlu0 %v1371, 111
    %v2115 = vpop.permute.xlu0 %2114
    %2116 = vrot.lane.b32.xlu0 %v1373, 111
    %v2117 = vpop.permute.xlu0 %2116
    %2118 = vrot.lane.b32.xlu0 %v1375, 111
    %v2119 = vpop.permute.xlu0 %2118
    %2120 = vrot.lane.b32.xlu0 %v1377, 111
    %v2121 = vpop.permute.xlu0 %2120
    %2122 = vrot.lane.b32.xlu0 %v1379, 111
    %v2123 = vpop.permute.xlu0 %2122
    %v2124 = vsel %vm1023, %v2101, %v2113
    %v2125 = vsel %vm1023, %v2103, %v2115
    %v2126 = vsel %vm1023, %v2105, %v2117
    %v2127 = vsel %vm1023, %v2107, %v2119
    %v2128 = vsel %vm1023, %v2109, %v2121
    %v2129 = vsel %vm1023, %v2111, %v2123
    %v2130 = vsel %vm1023, %v2113, %v2101
    %v2131 = vsel %vm1023, %v2115, %v2103
    %v2132 = vsel %vm1023, %v2117, %v2105
    %v2133 = vsel %vm1023, %v2119, %v2107
    %v2134 = vsel %vm1023, %v2121, %v2109
    %v2135 = vsel %vm1023, %v2123, %v2111
    %v2136 = vsel %vm1040, %v2124, 0.0
    %v2137 = vsel %vm1041, %v2130, 0.0
    %v2138 = vsel %vm1040, %v2125, 0.0
    %v2139 = vsel %vm1041, %v2131, 0.0
    %v2140 = vsel %vm1040, %v2126, 0.0
    %v2141 = vsel %vm1041, %v2132, 0.0
    %v2142 = vsel %vm1040, %v2127, 0.0
    %v2143 = vsel %vm1041, %v2133, 0.0
    %v2144 = vsel %vm1040, %v2128, 0.0
    %v2145 = vsel %vm1041, %v2134, 0.0
    %v2146 = vsel %vm1040, %v2129, 0.0
    %v2147 = vsel %vm1041, %v2135, 0.0
    %2148 = vset.pattern.permute.xlu0 8
    %2149 = vperm.xlu0 %2148, %v1380
    %v2150 = vpop.permute.xlu0 %2149
    %2152 = vset.pattern.permute.xlu0 8
    %2153 = vperm.xlu0 %2152, %v1381
    %v2154 = vpop.permute.xlu0 %2153
    %2156 = vset.pattern.permute.xlu0 8
    %2157 = vperm.xlu0 %2156, %v1382
    %v2158 = vpop.permute.xlu0 %2157
    %2160 = vset.pattern.permute.xlu0 8
    %2161 = vperm.xlu0 %2160, %v1383
    %v2162 = vpop.permute.xlu0 %2161
    %2164 = vset.pattern.permute.xlu0 8
    %2165 = vperm.xlu0 %2164, %v1384
    %v2166 = vpop.permute.xlu0 %2165
    %2168 = vset.pattern.permute.xlu0 8
    %2169 = vperm.xlu0 %2168, %v1385
    %v2170 = vpop.permute.xlu0 %2169
    %v2172 = vmul.f32 %v2136, %v2150
    %v2173 = vmul.f32 %v2137, %v2150
    %v2174 = vmul.f32 %v2138, %v2154
    %v2175 = vmul.f32 %v2139, %v2154
    %v2176 = vmul.f32 %v2140, %v2158
    %v2177 = vmul.f32 %v2141, %v2158
    %v2178 = vmul.f32 %v2142, %v2162
    %v2179 = vmul.f32 %v2143, %v2162
    %v2180 = vmul.f32 %v2144, %v2166
    %v2181 = vmul.f32 %v2145, %v2166
    %v2182 = vmul.f32 %v2146, %v2170
    %v2183 = vmul.f32 %v2147, %v2170
    %v2184 = vadd.f32 %v2088, %v2172
    %v2185 = vadd.f32 %v2089, %v2173
    %v2186 = vadd.f32 %v2090, %v2174
    %v2187 = vadd.f32 %v2091, %v2175
    %v2188 = vadd.f32 %v2092, %v2176
    %v2189 = vadd.f32 %v2093, %v2177
    %v2190 = vadd.f32 %v2094, %v2178
    %v2191 = vadd.f32 %v2095, %v2179
    %v2192 = vadd.f32 %v2096, %v2180
    %v2193 = vadd.f32 %v2097, %v2181
    %v2194 = vadd.f32 %v2098, %v2182
    %v2195 = vadd.f32 %v2099, %v2183
    %v2196 = vadd.f32 %v2184, %v1105
    %v2197 = vadd.f32 %v2185, %v1105
    %v2198 = vadd.f32 %v2186, %v1110
    %v2199 = vadd.f32 %v2187, %v1110
    %v2200 = vadd.f32 %v2188, %v1115
    %v2201 = vadd.f32 %v2189, %v1115
    %v2202 = vadd.f32 %v2190, %v1120
    %v2203 = vadd.f32 %v2191, %v1120
    %v2204 = vadd.f32 %v2192, %v1125
    %v2205 = vadd.f32 %v2193, %v1125
    %v2206 = vadd.f32 %v2194, %v1130
    %v2207 = vadd.f32 %v2195, %v1130
    %v2208 = vmax.f32 %v2196, 0.0
    %v2209 = vmax.f32 %v2197, 0.0
    %v2210 = vmax.f32 %v2198, 0.0
    %v2211 = vmax.f32 %v2199, 0.0
    %v2212 = vmax.f32 %v2200, 0.0
    %v2213 = vmax.f32 %v2201, 0.0
    %v2214 = vmax.f32 %v2202, 0.0
    %v2215 = vmax.f32 %v2203, 0.0
    %v2216 = vmax.f32 %v2204, 0.0
    %v2217 = vmax.f32 %v2205, 0.0
    %v2218 = vmax.f32 %v2206, 0.0
    %v2219 = vmax.f32 %v2207, 0.0
    %v2220 = vmin.f32 %v2208, 6.0
    %v2221 = vmin.f32 %v2209, 6.0
    %v2222 = vmin.f32 %v2210, 6.0
    %v2223 = vmin.f32 %v2211, 6.0
    %v2224 = vmin.f32 %v2212, 6.0
    %v2225 = vmin.f32 %v2213, 6.0
    %v2226 = vmin.f32 %v2214, 6.0
    %v2227 = vmin.f32 %v2215, 6.0
    %v2228 = vmin.f32 %v2216, 6.0
    %v2229 = vmin.f32 %v2217, 6.0
    %v2230 = vmin.f32 %v2218, 6.0
    %v2231 = vmin.f32 %v2219, 6.0
    %2232 = vmatprep.subr.mxu0 %v2221
    %2233 = vmatpush1.msra.mxu0 %v2220
    %2234 = vmatprep.subr.mxu0 %v2223
    %2235 = vmatpush1.msra.mxu0 %v2222
    %2236 = vmatprep.subr.mxu0 %v2225
    %2237 = vmatpush1.msra.mxu0 %v2224
    %2238 = vmatprep.subr.mxu0 %v2227
    %2239 = vmatpush1.msra.mxu0 %v2226
    %2240 = vmatprep.subr.mxu0 %v2229
    %2241 = vmatpush1.msra.mxu0 %v2228
    %2242 = vmatprep.subr.mxu0 %v2231
    %2243 = vmatpush1.msra.mxu0 %v2230
    %2244 = vmatprep.subr.mxu0 0.0
    %2245 = vmatpush1.msra.mxu0 0.0
    %2246 = vmatprep.subr.mxu0 0.0
    %2247 = vmatpush1.msra.mxu0 0.0
    %2248 = vmatprep.subr.mxu0 0.0
    %2249 = vmatpush1.msra.mxu0 0.0
    %2250 = vmatprep.subr.mxu0 0.0
    %2251 = vmatpush1.msra.mxu0 0.0
    %2252 = vmatprep.subr.mxu0 0.0
    %2253 = vmatpush1.msra.mxu0 0.0
    %2254 = vmatprep.subr.mxu0 0.0
    %2255 = vmatpush1.msra.mxu0 0.0
    %2256 = vmatprep.subr.mxu0 0.0
    %2257 = vmatpush1.msra.mxu0 0.0
    %2258 = vmatprep.subr.mxu0 0.0
    %2259 = vmatpush1.msra.mxu0 0.0
    %2260 = vmatprep.subr.mxu0 0.0
    %2261 = vmatpush1.msra.mxu0 0.0
    %2262 = vmatprep.subr.mxu0 0.0
    %2263 = vmatpush1.msra.mxu0 0.0
    %2264 = vmatprep.subr.mxu0 0.0
    %2265 = vmatpush1.msra.mxu0 0.0
    %2266 = vmatprep.subr.mxu0 0.0
    %2267 = vmatpush1.msra.mxu0 0.0
    %2268 = vmatprep.subr.mxu0 0.0
    %2269 = vmatpush1.msra.mxu0 0.0
    %2270 = vmatprep.subr.mxu0 0.0
    %2271 = vmatpush1.msra.mxu0 0.0
    %2272 = vmatprep.subr.mxu0 0.0
    %2273 = vmatpush1.msra.mxu0 0.0
    %2274 = vmatprep.subr.mxu0 0.0
    %2275 = vmatpush1.msra.mxu0 0.0
    %2276 = vmatprep.subr.mxu0 0.0
    %2277 = vmatpush1.msra.mxu0 0.0
    %2278 = vmatprep.subr.mxu0 0.0
    %2279 = vmatpush1.msra.mxu0 0.0
    %2280 = vmatprep.subr.mxu0 0.0
    %2281 = vmatpush1.msra.mxu0 0.0
    %2282 = vmatprep.subr.mxu0 0.0
    %2283 = vmatpush1.msra.mxu0 0.0
    %2284 = vmatprep.subr.mxu0 0.0
    %2285 = vmatpush1.msra.mxu0 0.0
    %2286 = vmatprep.subr.mxu0 0.0
    %2287 = vmatpush1.msra.mxu0 0.0
    %2288 = vmatprep.subr.mxu0 0.0
    %2289 = vmatpush1.msra.mxu0 0.0
    %2290 = vmatprep.subr.mxu0 0.0
    %2291 = vmatpush1.msra.mxu0 0.0
    %2292 = vmatprep.subr.mxu0 0.0
    %2293 = vmatpush1.msra.mxu0 0.0
    %2294 = vmatprep.subr.mxu0 0.0
    %2295 = vmatpush1.msra.mxu0 0.0
    %2296 = vmatprep.mubr.f32.mxu0 0.0
    %2297 = vmatmul.mubr.f32.gmra.mrb[0].mxu0 %v1175
    %v2298 = vpop.f32.mrb[0].mxu0
    %v2299 = vadd.f32 %v1171, %v2298
    %v2300 = vpop.f32.mrb[0].mxu0
    %v2301 = vadd.f32 %v1171, %v2300
    %2302 = vdwg.mxu0
    %v2303 = vadd.f32 %v2299, %v1253
    %v2304 = vadd.f32 %v2301, %v1254
    %s2305 = scalar_lea.vmem [#allocation2], 16
    %2306 = vst [vmem:[%s2305] sm:$0xff] %v2303
    %2307 = vst [vmem:[%s2305 + $0x8] sm:$0xff] %v2304
    // Predicated region
    $region30: #{tpu_custom_call.1} parent=1 // pred_check
      _
    $region31: #{tpu_custom_call.1} parent=1 // pred_check_branch
      %2309 = sbr.rel (0) target = $region33
    $region32: #{tpu_custom_call.1} parent=1 // pred_region
      %s2311 = ssub.s32 512, 512
      %2312 = vsyncadd [#allocation3], %s2311
      %s2313 = sshll.u32 [#allocation2], 4
      %s2314 = int_to_ptr.vmem [resolvable:$true] %s2313
      %2319 = dma.vmem_to_hbm [thread:$0]  %s2314, 512, %s7, [#allocation3], 256, 256, 16
    $region33: #{tpu_custom_call.1} parent=1 // pred_fallthru
      _
    // Predicated region
    $region34: #{tpu_custom_call.1} parent=1 // pred_check
      _
    $region35: #{tpu_custom_call.1} parent=1 // pred_check_branch
      %2321 = sbr.rel (0) target = $region37
    $region36: #{tpu_custom_call.1} parent=1 // pred_region
      %2322 = dma.done [#allocation3], 512
    $region37: #{tpu_custom_call.1} parent=1 // pred_fallthru
      _
    %2323 = vsyncpa [#allocation3], 1

</llo_original>
